<compile_context>
chip_gen: v7x
topology: tpu7x:2x2x1
jax: 0.10.0
libtpu: 0.0.40
codegen_flags: <defaults>
</compile_context>

<pallas_src>
import functools

import numpy as np
import jax
import jax.numpy as jnp
from jax import lax
from jax.experimental import pallas as pl
from jax.experimental.pallas import tpu as pltpu


def _crop_kernel(x_ref, mid_ref, crop_ref, pad_ref, *, L, C, S, B):
    """Single-shot kernel over all (segment, batch-row) pairs.

    x_ref    : (SB, L)  row r = i*S + s holds audio[i, s*L:(s+1)*L]
    mid_ref  : (SB, 1)  int32 window start m (0 / random / L-C)
    crop_ref : (SB, L)  cropped rows; only cols [0, L-C) are meaningful
    pad_ref  : (SB, L)  segment with [m, m+C) replaced by the neighbor row's
                        first C samples
    """
    SB = S * B
    x = x_ref[...]                                        # (SB, L) f32
    mid = mid_ref[...]                                    # (SB, 1) int32

    col = lax.broadcasted_iota(jnp.int32, x.shape, 1)     # shared lane iota
    row = lax.broadcasted_iota(jnp.int32, x.shape, 0)     # shared sublane iota

    # ---- cropped output: out[p] = x[p] if p < m else x[p + C] -------------
    # pltpu.roll follows jnp.roll semantics: roll(x, s)[p] = x[(p - s) mod L],
    # so shift = L - C realizes x[(p + C) mod L].  Columns [L-C, L) end up as
    # wrapped garbage; the wrapper slices them off, so no tail-zeroing select
    # and the store stays a full-width unmasked vst.
    x_shift = pltpu.roll(x, shift=L - C, axis=1)          # XLU slot
    crop_ref[...] = jnp.where(col < mid, x, x_shift)

    # ---- neighbor noise, gathered in-kernel (no extra input / XLA gather) --
    # Neighbor batch row j = i+1 (or B-2 for the last row).  In slab order
    # r = i*S + s that is r + S, except the last S rows which use r - S.
    nb_fwd = pltpu.roll(x, shift=SB - S, axis=0)          # row r -> x[(r+S) % SB]
    nb_bwd = pltpu.roll(x, shift=S, axis=0)               # row r -> x[(r-S) % SB]
    neighbor = jnp.where(row >= (B - 1) * S, nb_bwd, nb_fwd)

    # ---- padded output: x with [m, m+C) replaced by neighbor[0:C] ----------
    # Per-row placement via a barrel shift: for each bit b of m, conditionally
    # roll the neighbor slab right by 2**b lanes (select on that bit).  That
    # is O(log2 L) XLU rolls + one select per bit instead of a C-wide
    # compare / lane-broadcast / select chain on the VALUs.
    placed = neighbor
    n_bits = max((L - C).bit_length(), 1)                 # driver gives m <= L - C
    for b in range(n_bits):
        rolled = pltpu.roll(placed, shift=1 << b, axis=1)
        bit_set = (mid & (1 << b)) != 0                   # (SB, 1) bool
        placed = jnp.where(bit_set, rolled, placed)
    # placed[r, p] == neighbor[r, (p - m_r) mod L]; the window never wraps
    # because the driver guarantees 0 <= m <= L - C.
    d = col - mid
    pad_ref[...] = jnp.where((d >= 0) & (d < C), placed, x)


@functools.partial(jax.jit, static_argnums=(3, 4),
                   static_argnames=("segment_num", "ratio"))
def crop_new(audio, crop_locs, mids, segment_num=10, ratio=0.1):
    """JAX/Pallas equivalent of Crop_new.forward.

    audio     : (B, T) float32
    crop_locs : (S,)   int32 in {-1, 0, +1}  (per-segment crop location)
    mids      : (S, B) int32 in [C, L-2C-2]  (per-row mid_crop_begin, used
                only when crop_loc == 0)

    Returns stacked outputs (one slice total; consumers index lazily):
      crop : (B, S, L-C)   crop[:, s] == crop_audio_list[s] of the PyTorch op
      pad  : (B, S, L)     pad[:, s]  == pad_audio_list[s]
    """
    B, T = audio.shape
    S = segment_num
    L = T // S
    C = int(L * ratio)
    Lc = L - C
    SB = S * B

    # Unified window start per (segment, row): 0 / random mid / L-C.
    loc_col = crop_locs.astype(jnp.int32)[:, None]                 # (S, 1)
    m_all = jnp.where(loc_col == -1, 0,
                      jnp.where(loc_col == 1, L - C,
                                mids.astype(jnp.int32)))           # (S, B)
    mids2d = m_all.T.reshape(SB, 1)                                # r = i*S + s

    # (B, T) -> (B*S, L) is a free row-major reshape (no transpose).
    if T != S * L:
        audio = audio[:, :S * L]
    x2d = audio.reshape(SB, L)

    kernel = functools.partial(_crop_kernel, L=L, C=C, S=S, B=B)

    # Single grid step: the whole problem is ~250 KiB of VMEM, so one
    # lane/sublane-dense DMA per array beats pipelined steps (overhead-bound).
    # TODO(synk): add a leading "parallel" row-split grid dim if SB grows to
    # ~512+ rows so both v7x TensorCores are used.
    crop2d, pad2d = pl.pallas_call(
        kernel,
        out_shape=(jax.ShapeDtypeStruct((SB, L), audio.dtype),
                   jax.ShapeDtypeStruct((SB, L), audio.dtype)),
        grid_spec=pltpu.PrefetchScalarGridSpec(
            num_scalar_prefetch=0,
            grid=(1,),
            in_specs=[
                pl.BlockSpec((SB, L), lambda i: (0, 0)),   # segments-as-rows
                pl.BlockSpec((SB, 1), lambda i: (0, 0)),   # window starts
            ],
            out_specs=[
                pl.BlockSpec((SB, L), lambda i: (0, 0)),   # crop (lane-dense)
                pl.BlockSpec((SB, L), lambda i: (0, 0)),   # pad
            ],
        ),
        compiler_params=pltpu.CompilerParams(
            dimension_semantics=("arbitrary",)),
    )(x2d, mids2d)

    crop = crop2d[:, :Lc].reshape(B, S, Lc)
    pad = pad2d.reshape(B, S, L)
    return crop, pad


def crop_new_lists(audio, crop_locs, mids, segment_num=10, ratio=0.1):
    """Drop-in interface of the PyTorch module: [crop_audio_list, pad_audio_list].

    Only for interface compatibility -- it reintroduces 2*S small slice ops;
    prefer consuming the stacked outputs of crop_new directly.
    """
    crop, pad = crop_new(audio, crop_locs, mids,
                         segment_num=segment_num, ratio=ratio)
    return [[crop[:, s] for s in range(segment_num)],
            [pad[:, s] for s in range(segment_num)]]


def _reference(audio_np, crop_locs_np, mids_np, segment_num=10, ratio=0.1):
    """Numpy transcription of Crop_new.forward with the randomness fixed."""
    B, T = audio_np.shape
    L = T // segment_num
    C = int(L * ratio)
    crop_list, pad_list = [], []
    for s in range(segment_num):
        seg = audio_np[:, s * L:(s + 1) * L]
        loc = int(crop_locs_np[s])
        crop_rows, pad_rows = [], []
        for i in range(B):
            j = i + 1 if i < B - 1 else i - 1
            noise = seg[j, :C]
            if loc == -1:
                cropped = seg[i, C:]
                padded = np.concatenate([noise, cropped])
            elif loc == 0:
                m = int(mids_np[s, i])
                fore = seg[i, :m]
                last = seg[i, m + C:]
                cropped = np.concatenate([fore, last])
                padded = np.concatenate([fore, noise, last])
            else:
                cropped = seg[i, :L - C]
                padded = np.concatenate([cropped, noise])
            crop_rows.append(cropped)
            pad_rows.append(padded)
        crop_list.append(np.stack(crop_rows))
        pad_list.append(np.stack(pad_rows))
    return crop_list, pad_list


if __name__ == "__main__":
    key = jax.random.PRNGKey(0)
    B, S, L = 8, 10, 256            # batch, segments, samples per segment
    T = S * L
    ratio = 0.1
    C = int(L * ratio)

    k1, k2, k3 = jax.random.split(key, 3)
    audio = jax.random.normal(k1, (B, T), dtype=jnp.float32)
    # crop_loc ~ choice([-1, 0, 1]) per segment (np.random.choice in torch)
    crop_locs = jax.random.choice(k2, jnp.array([-1, 0, 1], dtype=jnp.int32), (S,))
    # mid_crop_begin ~ choice(range(C, L - 2*C - 1)) per (segment, batch row)
    mids = jax.random.randint(k3, (S, B), C, L - 2 * C - 1, dtype=jnp.int32)

    crop, pad = crop_new(audio, crop_locs, mids, segment_num=S, ratio=ratio)
    jax.block_until_ready((crop, pad))

    # verify against the numpy transcription of the PyTorch semantics
    crop_ref, pad_ref = _reference(np.asarray(audio), np.asarray(crop_locs),
                                   np.asarray(mids), S, ratio)
    crop_np, pad_np = np.asarray(crop), np.asarray(pad)
    for s in range(S):
        np.testing.assert_array_equal(crop_np[:, s], crop_ref[s])
        np.testing.assert_array_equal(pad_np[:, s], pad_ref[s])
    print("KERNEL_OK")
</pallas_src>

<mosaic_0001>
module attributes {stable_mosaic.version = 11 : i64} {
  func.func @_crop_kernel(%arg0: i32, %arg1: memref<80x256xf32, #tpu.memory_space<vmem>>, %arg2: memref<80x1xi32, #tpu.memory_space<vmem>>, %arg3: memref<80x256xf32, #tpu.memory_space<vmem>>, %arg4: memref<80x256xf32, #tpu.memory_space<vmem>>) attributes {dimension_semantics = [#tpu.dimension_semantics<arbitrary>], iteration_bounds = array<i64: 1>, scalar_prefetch = 0 : i64, scratch_operands = 0 : i64, tpu.core_type = #tpu.core_type<tc>, window_params = [{pipeline_mode = #tpu.pipeline_mode<synchronous>, transform_indices = @transform_0, window_bounds = array<i64: 80, 256>}, {pipeline_mode = #tpu.pipeline_mode<synchronous>, transform_indices = @transform_1, window_bounds = array<i64: 80, 1>}, {pipeline_mode = #tpu.pipeline_mode<synchronous>, transform_indices = @transform_2, window_bounds = array<i64: 80, 256>}, {pipeline_mode = #tpu.pipeline_mode<synchronous>, transform_indices = @transform_3, window_bounds = array<i64: 80, 256>}]} {
    %c0 = arith.constant 0 : index
    %c0_0 = arith.constant 0 : index
    %0 = vector.load %arg1[%c0, %c0_0] : memref<80x256xf32, #tpu.memory_space<vmem>>, vector<80x256xf32>
    %c0_1 = arith.constant 0 : index
    %c0_2 = arith.constant 0 : index
    %1 = vector.load %arg2[%c0_1, %c0_2] : memref<80x1xi32, #tpu.memory_space<vmem>>, vector<80x1xi32>
    %2 = tpu.iota {dimensions = array<i32: 1>} : vector<80x256xi32>
    %3 = tpu.iota {dimensions = array<i32: 0>} : vector<80x256xi32>
    %c231_i32 = arith.constant 231 : i32
    %4 = tpu.dynamic_rotate %0 by %c231_i32 dim 1 : vector<80x256xf32>, i32 -> vector<80x256xf32>
    %5 = vector.broadcast %1 : vector<80x1xi32> to vector<80x256xi32>
    %6 = arith.cmpi slt, %2, %5 : vector<80x256xi32>
    %7 = arith.select %6, %0, %4 : vector<80x256xi1>, vector<80x256xf32>
    %c0_3 = arith.constant 0 : index
    %c0_4 = arith.constant 0 : index
    %8 = vector.load %arg3[%c0_3, %c0_4] : memref<80x256xf32, #tpu.memory_space<vmem>>, vector<80x256xf32>
    tpu.vector_store %arg3[%c0_3, %c0_4], %7 {strides = array<i32>} : memref<80x256xf32, #tpu.memory_space<vmem>>, vector<80x256xf32>,
    %c70_i32 = arith.constant 70 : i32
    %9 = tpu.dynamic_rotate %0 by %c70_i32 dim 0 : vector<80x256xf32>, i32 -> vector<80x256xf32>
    %c10_i32 = arith.constant 10 : i32
    %10 = tpu.dynamic_rotate %0 by %c10_i32 dim 0 : vector<80x256xf32>, i32 -> vector<80x256xf32>
    %c70_i32_5 = arith.constant 70 : i32
    %11 = vector.broadcast %c70_i32_5 : i32 to vector<80x256xi32>
    %12 = arith.cmpi sge, %3, %11 : vector<80x256xi32>
    %13 = arith.select %12, %10, %9 : vector<80x256xi1>, vector<80x256xf32>
    %c1_i32 = arith.constant 1 : i32
    %14 = tpu.dynamic_rotate %13 by %c1_i32 dim 1 : vector<80x256xf32>, i32 -> vector<80x256xf32>
    %c1_i32_6 = arith.constant 1 : i32
    %15 = vector.broadcast %c1_i32_6 : i32 to vector<80x1xi32>
    %16 = arith.andi %1, %15 : vector<80x1xi32>
    %c0_i32 = arith.constant 0 : i32
    %17 = vector.broadcast %c0_i32 : i32 to vector<80x1xi32>
    %18 = arith.cmpi ne, %16, %17 : vector<80x1xi32>
    %19 = vector.shape_cast %18 : vector<80x1xi1> to vector<80x1xi1>
    %20 = vector.broadcast %19 : vector<80x1xi1> to vector<80x256xi1>
    %21 = arith.select %20, %14, %13 : vector<80x256xi1>, vector<80x256xf32>
    %c2_i32 = arith.constant 2 : i32
    %22 = tpu.dynamic_rotate %21 by %c2_i32 dim 1 : vector<80x256xf32>, i32 -> vector<80x256xf32>
    %c2_i32_7 = arith.constant 2 : i32
    %23 = vector.broadcast %c2_i32_7 : i32 to vector<80x1xi32>
    %24 = arith.andi %1, %23 : vector<80x1xi32>
    %c0_i32_8 = arith.constant 0 : i32
    %25 = vector.broadcast %c0_i32_8 : i32 to vector<80x1xi32>
    %26 = arith.cmpi ne, %24, %25 : vector<80x1xi32>
    %27 = vector.shape_cast %26 : vector<80x1xi1> to vector<80x1xi1>
    %28 = vector.broadcast %27 : vector<80x1xi1> to vector<80x256xi1>
    %29 = arith.select %28, %22, %21 : vector<80x256xi1>, vector<80x256xf32>
    %c4_i32 = arith.constant 4 : i32
    %30 = tpu.dynamic_rotate %29 by %c4_i32 dim 1 : vector<80x256xf32>, i32 -> vector<80x256xf32>
    %c4_i32_9 = arith.constant 4 : i32
    %31 = vector.broadcast %c4_i32_9 : i32 to vector<80x1xi32>
    %32 = arith.andi %1, %31 : vector<80x1xi32>
    %c0_i32_10 = arith.constant 0 : i32
    %33 = vector.broadcast %c0_i32_10 : i32 to vector<80x1xi32>
    %34 = arith.cmpi ne, %32, %33 : vector<80x1xi32>
    %35 = vector.shape_cast %34 : vector<80x1xi1> to vector<80x1xi1>
    %36 = vector.broadcast %35 : vector<80x1xi1> to vector<80x256xi1>
    %37 = arith.select %36, %30, %29 : vector<80x256xi1>, vector<80x256xf32>
    %c8_i32 = arith.constant 8 : i32
    %38 = tpu.dynamic_rotate %37 by %c8_i32 dim 1 : vector<80x256xf32>, i32 -> vector<80x256xf32>
    %c8_i32_11 = arith.constant 8 : i32
    %39 = vector.broadcast %c8_i32_11 : i32 to vector<80x1xi32>
    %40 = arith.andi %1, %39 : vector<80x1xi32>
    %c0_i32_12 = arith.constant 0 : i32
    %41 = vector.broadcast %c0_i32_12 : i32 to vector<80x1xi32>
    %42 = arith.cmpi ne, %40, %41 : vector<80x1xi32>
    %43 = vector.shape_cast %42 : vector<80x1xi1> to vector<80x1xi1>
    %44 = vector.broadcast %43 : vector<80x1xi1> to vector<80x256xi1>
    %45 = arith.select %44, %38, %37 : vector<80x256xi1>, vector<80x256xf32>
    %c16_i32 = arith.constant 16 : i32
    %46 = tpu.dynamic_rotate %45 by %c16_i32 dim 1 : vector<80x256xf32>, i32 -> vector<80x256xf32>
    %c16_i32_13 = arith.constant 16 : i32
    %47 = vector.broadcast %c16_i32_13 : i32 to vector<80x1xi32>
    %48 = arith.andi %1, %47 : vector<80x1xi32>
    %c0_i32_14 = arith.constant 0 : i32
    %49 = vector.broadcast %c0_i32_14 : i32 to vector<80x1xi32>
    %50 = arith.cmpi ne, %48, %49 : vector<80x1xi32>
    %51 = vector.shape_cast %50 : vector<80x1xi1> to vector<80x1xi1>
    %52 = vector.broadcast %51 : vector<80x1xi1> to vector<80x256xi1>
    %53 = arith.select %52, %46, %45 : vector<80x256xi1>, vector<80x256xf32>
    %c32_i32 = arith.constant 32 : i32
    %54 = tpu.dynamic_rotate %53 by %c32_i32 dim 1 : vector<80x256xf32>, i32 -> vector<80x256xf32>
    %c32_i32_15 = arith.constant 32 : i32
    %55 = vector.broadcast %c32_i32_15 : i32 to vector<80x1xi32>
    %56 = arith.andi %1, %55 : vector<80x1xi32>
    %c0_i32_16 = arith.constant 0 : i32
    %57 = vector.broadcast %c0_i32_16 : i32 to vector<80x1xi32>
    %58 = arith.cmpi ne, %56, %57 : vector<80x1xi32>
    %59 = vector.shape_cast %58 : vector<80x1xi1> to vector<80x1xi1>
    %60 = vector.broadcast %59 : vector<80x1xi1> to vector<80x256xi1>
    %61 = arith.select %60, %54, %53 : vector<80x256xi1>, vector<80x256xf32>
    %c64_i32 = arith.constant 64 : i32
    %62 = tpu.dynamic_rotate %61 by %c64_i32 dim 1 : vector<80x256xf32>, i32 -> vector<80x256xf32>
    %c64_i32_17 = arith.constant 64 : i32
    %63 = vector.broadcast %c64_i32_17 : i32 to vector<80x1xi32>
    %64 = arith.andi %1, %63 : vector<80x1xi32>
    %c0_i32_18 = arith.constant 0 : i32
    %65 = vector.broadcast %c0_i32_18 : i32 to vector<80x1xi32>
    %66 = arith.cmpi ne, %64, %65 : vector<80x1xi32>
    %67 = vector.shape_cast %66 : vector<80x1xi1> to vector<80x1xi1>
    %68 = vector.broadcast %67 : vector<80x1xi1> to vector<80x256xi1>
    %69 = arith.select %68, %62, %61 : vector<80x256xi1>, vector<80x256xf32>
    %c128_i32 = arith.constant 128 : i32
    %70 = tpu.dynamic_rotate %69 by %c128_i32 dim 1 : vector<80x256xf32>, i32 -> vector<80x256xf32>
    %c128_i32_19 = arith.constant 128 : i32
    %71 = vector.broadcast %c128_i32_19 : i32 to vector<80x1xi32>
    %72 = arith.andi %1, %71 : vector<80x1xi32>
    %c0_i32_20 = arith.constant 0 : i32
    %73 = vector.broadcast %c0_i32_20 : i32 to vector<80x1xi32>
    %74 = arith.cmpi ne, %72, %73 : vector<80x1xi32>
    %75 = vector.shape_cast %74 : vector<80x1xi1> to vector<80x1xi1>
    %76 = vector.broadcast %75 : vector<80x1xi1> to vector<80x256xi1>
    %77 = arith.select %76, %70, %69 : vector<80x256xi1>, vector<80x256xf32>
    %78 = vector.broadcast %1 : vector<80x1xi32> to vector<80x256xi32>
    %79 = arith.subi %2, %78 : vector<80x256xi32>
    %c0_i32_21 = arith.constant 0 : i32
    %80 = vector.broadcast %c0_i32_21 : i32 to vector<80x256xi32>
    %81 = arith.cmpi sge, %79, %80 : vector<80x256xi32>
    %c25_i32 = arith.constant 25 : i32
    %82 = vector.broadcast %c25_i32 : i32 to vector<80x256xi32>
    %83 = arith.cmpi slt, %79, %82 : vector<80x256xi32>
    %84 = arith.andi %81, %83 : vector<80x256xi1>
    %85 = arith.select %84, %77, %0 : vector<80x256xi1>, vector<80x256xf32>
    %c0_22 = arith.constant 0 : index
    %c0_23 = arith.constant 0 : index
    %86 = vector.load %arg4[%c0_22, %c0_23] : memref<80x256xf32, #tpu.memory_space<vmem>>, vector<80x256xf32>
    tpu.vector_store %arg4[%c0_22, %c0_23], %85 {strides = array<i32>} : memref<80x256xf32, #tpu.memory_space<vmem>>, vector<80x256xf32>,
    return
  }
  func.func @transform_0(%arg0: i32) -> (i32, i32) {
    %c0_i32 = arith.constant 0 : i32
    %c0_i32_0 = arith.constant 0 : i32
    %c0_i32_1 = arith.constant 0 : i32
    return %c0_i32, %c0_i32_0 : i32, i32
  }
  func.func @transform_1(%arg0: i32) -> (i32, i32) {
    %c0_i32 = arith.constant 0 : i32
    %c0_i32_0 = arith.constant 0 : i32
    %c0_i32_1 = arith.constant 0 : i32
    return %c0_i32, %c0_i32_0 : i32, i32
  }
  func.func @transform_2(%arg0: i32) -> (i32, i32) {
    %c0_i32 = arith.constant 0 : i32
    %c0_i32_0 = arith.constant 0 : i32
    %c0_i32_1 = arith.constant 0 : i32
    return %c0_i32, %c0_i32_0 : i32, i32
  }
  func.func @transform_3(%arg0: i32) -> (i32, i32) {
    %c0_i32 = arith.constant 0 : i32
    %c0_i32_0 = arith.constant 0 : i32
    %c0_i32_1 = arith.constant 0 : i32
    return %c0_i32, %c0_i32_0 : i32, i32
  }
}

</mosaic_0001>

<llo_original>
// kernel: crop_new.1
$region0: #{crop_new.1}
  #allocation0 [shape = 'u32[]', space=smem, size = 0x4, offset = 0x4, fixed_abs, tag = 'smem constant byte address 0x4 - core index']
  #allocation1 [shape = 'u32[144,128]{1,0:T(1,128)}', space=vmem, size = 0x12000, scoped, tag = 'internal scratch']
  %s0 = inlined_call_operand.vmem [shape: f32[80,256], index: 0, kind: input, shape index: {}]
  %s1 = inlined_call_operand.vmem [shape: s32[80,1], index: 1, kind: input, shape index: {}]
  %s2 = inlined_call_operand.vmem [shape: f32[80,256], index: 2, kind: output, shape index: {0}]
  %s3 = inlined_call_operand.vmem [shape: f32[80,256], index: 3, kind: output, shape index: {1}]
  %4 = xla_tuple %s2, %s3
  %s5 = sld [smem:[#allocation0]]
  $region26: #{crop_new.1} parent=0
    _
  %s7 = ssub.s32 1, %s5
  %s8 = scalar_select 0, %s7, %s5
  // Predicated region
  $region2: #{crop_new.1} parent=0 // pred_check
    _
  $region3: #{crop_new.1} parent=0 // pred_check_branch
    %10 = sbr.rel (0) target = $region5
  $region4: #{crop_new.1} parent=0 // pred_region
    _
  $region5: #{crop_new.1} parent=0 // pred_fallthru
    _
  // Predicated region
  $region6: #{crop_new.1} parent=0 // pred_check
    _
  $region7: #{crop_new.1} parent=0 // pred_check_branch
    %12 = sbr.rel (0) target = $region9
  $region8: #{crop_new.1} parent=0 // pred_region
    _
  $region9: #{crop_new.1} parent=0 // pred_fallthru
    _
  %v13 = vld [vmem:[%s0] sm:$0xff]
  %v14 = vld [vmem:[%s0 + $0x8] sm:$0xff]
  %v15 = vld [vmem:[%s0 + $0x10] sm:$0xff]
  %v16 = vld [vmem:[%s0 + $0x18] sm:$0xff]
  %v17 = vld [vmem:[%s0 + $0x20] sm:$0xff]
  %v18 = vld [vmem:[%s0 + $0x28] sm:$0xff]
  %v19 = vld [vmem:[%s0 + $0x30] sm:$0xff]
  %v20 = vld [vmem:[%s0 + $0x38] sm:$0xff]
  %v21 = vld [vmem:[%s0 + $0x40] sm:$0xff]
  %v22 = vld [vmem:[%s0 + $0x48] sm:$0xff]
  %v23 = vld [vmem:[%s0 + $0x50] sm:$0xff]
  %v24 = vld [vmem:[%s0 + $0x58] sm:$0xff]
  %v25 = vld [vmem:[%s0 + $0x60] sm:$0xff]
  %v26 = vld [vmem:[%s0 + $0x68] sm:$0xff]
  %v27 = vld [vmem:[%s0 + $0x70] sm:$0xff]
  %v28 = vld [vmem:[%s0 + $0x78] sm:$0xff]
  %v29 = vld [vmem:[%s0 + $0x80] sm:$0xff]
  %v30 = vld [vmem:[%s0 + $0x88] sm:$0xff]
  %v31 = vld [vmem:[%s0 + $0x90] sm:$0xff]
  %v32 = vld [vmem:[%s0 + $0x98] sm:$0xff]
  %v33 = vld [vmem:[%s1] sm:$0xff]
  %v34 = vld [vmem:[%s1 + $0x8] sm:$0xff]
  %v35 = vld [vmem:[%s1 + $0x10] sm:$0xff]
  %v36 = vld [vmem:[%s1 + $0x18] sm:$0xff]
  %v37 = vld [vmem:[%s1 + $0x20] sm:$0xff]
  %v38 = vld [vmem:[%s1 + $0x28] sm:$0xff]
  %v39 = vld [vmem:[%s1 + $0x30] sm:$0xff]
  %v40 = vld [vmem:[%s1 + $0x38] sm:$0xff]
  %v41 = vld [vmem:[%s1 + $0x40] sm:$0xff]
  %v42 = vld [vmem:[%s1 + $0x48] sm:$0xff]
  %v43 = vlaneseq
  %v44 = vand.u32 %v43, 127
  %v45 = vadd.s32 %v44, 128
  %v46 = vlaneseq
  %v47 = vshrl.u32 %v46, 7
  %v48 = vadd.s32 %v47, 8
  %v49 = vadd.s32 %v47, 16
  %v50 = vadd.s32 %v47, 24
  %v51 = vadd.s32 %v47, 32
  %v52 = vadd.s32 %v47, 40
  %v53 = vadd.s32 %v47, 48
  %v54 = vadd.s32 %v47, 56
  %v55 = vadd.s32 %v47, 64
  %v56 = vadd.s32 %v47, 72
  %57 = vrot.lane.b32.xlu0 %v13, 103
  %v58 = vpop.permute.xlu0 %57
  %59 = vrot.lane.b32.xlu0 %v15, 103
  %v60 = vpop.permute.xlu0 %59
  %61 = vrot.lane.b32.xlu0 %v17, 103
  %v62 = vpop.permute.xlu0 %61
  %63 = vrot.lane.b32.xlu0 %v19, 103
  %v64 = vpop.permute.xlu0 %63
  %65 = vrot.lane.b32.xlu0 %v21, 103
  %v66 = vpop.permute.xlu0 %65
  %67 = vrot.lane.b32.xlu0 %v23, 103
  %v68 = vpop.permute.xlu0 %67
  %69 = vrot.lane.b32.xlu0 %v25, 103
  %v70 = vpop.permute.xlu0 %69
  %71 = vrot.lane.b32.xlu0 %v27, 103
  %v72 = vpop.permute.xlu0 %71
  %73 = vrot.lane.b32.xlu0 %v29, 103
  %v74 = vpop.permute.xlu0 %73
  %75 = vrot.lane.b32.xlu0 %v31, 103
  %v76 = vpop.permute.xlu0 %75
  %77 = vrot.lane.b32.xlu0 %v14, 103
  %v78 = vpop.permute.xlu0 %77
  %79 = vrot.lane.b32.xlu0 %v16, 103
  %v80 = vpop.permute.xlu0 %79
  %81 = vrot.lane.b32.xlu0 %v18, 103
  %v82 = vpop.permute.xlu0 %81
  %83 = vrot.lane.b32.xlu0 %v20, 103
  %v84 = vpop.permute.xlu0 %83
  %85 = vrot.lane.b32.xlu0 %v22, 103
  %v86 = vpop.permute.xlu0 %85
  %87 = vrot.lane.b32.xlu0 %v24, 103
  %v88 = vpop.permute.xlu0 %87
  %89 = vrot.lane.b32.xlu0 %v26, 103
  %v90 = vpop.permute.xlu0 %89
  %91 = vrot.lane.b32.xlu0 %v28, 103
  %v92 = vpop.permute.xlu0 %91
  %93 = vrot.lane.b32.xlu0 %v30, 103
  %v94 = vpop.permute.xlu0 %93
  %95 = vrot.lane.b32.xlu0 %v32, 103
  %v96 = vpop.permute.xlu0 %95
  %vm97 = vcmp.lt.s32.totalorder %v44, 103
  %v98 = vsel %vm97, %v58, %v78
  %v99 = vsel %vm97, %v60, %v80
  %v100 = vsel %vm97, %v62, %v82
  %v101 = vsel %vm97, %v64, %v84
  %v102 = vsel %vm97, %v66, %v86
  %v103 = vsel %vm97, %v68, %v88
  %v104 = vsel %vm97, %v70, %v90
  %v105 = vsel %vm97, %v72, %v92
  %v106 = vsel %vm97, %v74, %v94
  %v107 = vsel %vm97, %v76, %v96
  %v108 = vsel %vm97, %v78, %v58
  %v109 = vsel %vm97, %v80, %v60
  %v110 = vsel %vm97, %v82, %v62
  %v111 = vsel %vm97, %v84, %v64
  %v112 = vsel %vm97, %v86, %v66
  %v113 = vsel %vm97, %v88, %v68
  %v114 = vsel %vm97, %v90, %v70
  %v115 = vsel %vm97, %v92, %v72
  %v116 = vsel %vm97, %v94, %v74
  %v117 = vsel %vm97, %v96, %v76
  %118 = vset.pattern.permute.xlu0 0
  %119 = vperm.xlu0 %118, %v33
  %v120 = vpop.permute.xlu0 %119
  %121 = vset.pattern.permute.xlu0 0
  %122 = vperm.xlu0 %121, %v34
  %v123 = vpop.permute.xlu0 %122
  %124 = vset.pattern.permute.xlu0 0
  %125 = vperm.xlu0 %124, %v35
  %v126 = vpop.permute.xlu0 %125
  %127 = vset.pattern.permute.xlu0 0
  %128 = vperm.xlu0 %127, %v36
  %v129 = vpop.permute.xlu0 %128
  %130 = vset.pattern.permute.xlu0 0
  %131 = vperm.xlu0 %130, %v37
  %v132 = vpop.permute.xlu0 %131
  %133 = vset.pattern.permute.xlu0 0
  %134 = vperm.xlu0 %133, %v38
  %v135 = vpop.permute.xlu0 %134
  %136 = vset.pattern.permute.xlu0 0
  %137 = vperm.xlu0 %136, %v39
  %v138 = vpop.permute.xlu0 %137
  %139 = vset.pattern.permute.xlu0 0
  %140 = vperm.xlu0 %139, %v40
  %v141 = vpop.permute.xlu0 %140
  %142 = vset.pattern.permute.xlu0 0
  %143 = vperm.xlu0 %142, %v41
  %v144 = vpop.permute.xlu0 %143
  %145 = vset.pattern.permute.xlu0 0
  %146 = vperm.xlu0 %145, %v42
  %v147 = vpop.permute.xlu0 %146
  %vm148 = vcmp.lt.s32.totalorder %v44, %v120
  %vm149 = vcmp.lt.s32.totalorder %v45, %v120
  %vm150 = vcmp.lt.s32.totalorder %v44, %v123
  %vm151 = vcmp.lt.s32.totalorder %v45, %v123
  %vm152 = vcmp.lt.s32.totalorder %v44, %v126
  %vm153 = vcmp.lt.s32.totalorder %v45, %v126
  %vm154 = vcmp.lt.s32.totalorder %v44, %v129
  %vm155 = vcmp.lt.s32.totalorder %v45, %v129
  %vm156 = vcmp.lt.s32.totalorder %v44, %v132
  %vm157 = vcmp.lt.s32.totalorder %v45, %v132
  %vm158 = vcmp.lt.s32.totalorder %v44, %v135
  %vm159 = vcmp.lt.s32.totalorder %v45, %v135
  %vm160 = vcmp.lt.s32.totalorder %v44, %v138
  %vm161 = vcmp.lt.s32.totalorder %v45, %v138
  %vm162 = vcmp.lt.s32.totalorder %v44, %v141
  %vm163 = vcmp.lt.s32.totalorder %v45, %v141
  %vm164 = vcmp.lt.s32.totalorder %v44, %v144
  %vm165 = vcmp.lt.s32.totalorder %v45, %v144
  %vm166 = vcmp.lt.s32.totalorder %v44, %v147
  %vm167 = vcmp.lt.s32.totalorder %v45, %v147
  %v168 = vsel %vm148, %v13, %v98
  %v169 = vsel %vm149, %v14, %v108
  %v170 = vsel %vm150, %v15, %v99
  %v171 = vsel %vm151, %v16, %v109
  %v172 = vsel %vm152, %v17, %v100
  %v173 = vsel %vm153, %v18, %v110
  %v174 = vsel %vm154, %v19, %v101
  %v175 = vsel %vm155, %v20, %v111
  %v176 = vsel %vm156, %v21, %v102
  %v177 = vsel %vm157, %v22, %v112
  %v178 = vsel %vm158, %v23, %v103
  %v179 = vsel %vm159, %v24, %v113
  %v180 = vsel %vm160, %v25, %v104
  %v181 = vsel %vm161, %v26, %v114
  %v182 = vsel %vm162, %v27, %v105
  %v183 = vsel %vm163, %v28, %v115
  %v184 = vsel %vm164, %v29, %v106
  %v185 = vsel %vm165, %v30, %v116
  %v186 = vsel %vm166, %v31, %v107
  %v187 = vsel %vm167, %v32, %v117
  %188 = vst [vmem:[%s2] sm:$0xff] %v168
  %189 = vst [vmem:[%s2 + $0x8] sm:$0xff] %v169
  %190 = vst [vmem:[%s2 + $0x10] sm:$0xff] %v170
  %191 = vst [vmem:[%s2 + $0x18] sm:$0xff] %v171
  %192 = vst [vmem:[%s2 + $0x20] sm:$0xff] %v172
  %193 = vst [vmem:[%s2 + $0x28] sm:$0xff] %v173
  %194 = vst [vmem:[%s2 + $0x30] sm:$0xff] %v174
  %195 = vst [vmem:[%s2 + $0x38] sm:$0xff] %v175
  %196 = vst [vmem:[%s2 + $0x40] sm:$0xff] %v176
  %197 = vst [vmem:[%s2 + $0x48] sm:$0xff] %v177
  %198 = vst [vmem:[%s2 + $0x50] sm:$0xff] %v178
  %199 = vst [vmem:[%s2 + $0x58] sm:$0xff] %v179
  %200 = vst [vmem:[%s2 + $0x60] sm:$0xff] %v180
  %201 = vst [vmem:[%s2 + $0x68] sm:$0xff] %v181
  %202 = vst [vmem:[%s2 + $0x70] sm:$0xff] %v182
  %203 = vst [vmem:[%s2 + $0x78] sm:$0xff] %v183
  %204 = vst [vmem:[%s2 + $0x80] sm:$0xff] %v184
  %205 = vst [vmem:[%s2 + $0x88] sm:$0xff] %v185
  %206 = vst [vmem:[%s2 + $0x90] sm:$0xff] %v186
  %207 = vst [vmem:[%s2 + $0x98] sm:$0xff] %v187
  %v208 = vrot.slane %v13, 2
  %v209 = vrot.slane %v14, 2
  %v210 = vrot.slane %v15, 2
  %v211 = vrot.slane %v16, 2
  %v212 = vrot.slane %v17, 2
  %v213 = vrot.slane %v18, 2
  %v214 = vrot.slane %v19, 2
  %v215 = vrot.slane %v20, 2
  %v216 = vrot.slane %v21, 2
  %v217 = vrot.slane %v22, 2
  %v218 = vrot.slane %v23, 2
  %v219 = vrot.slane %v24, 2
  %v220 = vrot.slane %v25, 2
  %v221 = vrot.slane %v26, 2
  %v222 = vrot.slane %v27, 2
  %v223 = vrot.slane %v28, 2
  %v224 = vrot.slane %v29, 2
  %v225 = vrot.slane %v30, 2
  %v226 = vrot.slane %v31, 2
  %v227 = vrot.slane %v32, 2
  %vm228 = vcmp.lt.s32.totalorder %v47, 6
  %v229 = vsel %vm228, %v224, %v226
  %v230 = vsel %vm228, %v225, %v227
  %v231 = vsel %vm228, %v222, %v224
  %v232 = vsel %vm228, %v223, %v225
  %v233 = vsel %vm228, %v220, %v222
  %v234 = vsel %vm228, %v221, %v223
  %v235 = vsel %vm228, %v218, %v220
  %v236 = vsel %vm228, %v219, %v221
  %v237 = vsel %vm228, %v216, %v218
  %v238 = vsel %vm228, %v217, %v219
  %v239 = vsel %vm228, %v214, %v216
  %v240 = vsel %vm228, %v215, %v217
  %v241 = vsel %vm228, %v212, %v214
  %v242 = vsel %vm228, %v213, %v215
  %v243 = vsel %vm228, %v210, %v212
  %v244 = vsel %vm228, %v211, %v213
  %v245 = vsel %vm228, %v208, %v210
  %v246 = vsel %vm228, %v209, %v211
  %v247 = vsel %vm228, %v226, %v208
  %v248 = vsel %vm228, %v227, %v209
  %v249 = vrot.slane %v13, 6
  %v250 = vrot.slane %v14, 6
  %v251 = vrot.slane %v15, 6
  %v252 = vrot.slane %v16, 6
  %v253 = vrot.slane %v17, 6
  %v254 = vrot.slane %v18, 6
  %v255 = vrot.slane %v19, 6
  %v256 = vrot.slane %v20, 6
  %v257 = vrot.slane %v21, 6
  %v258 = vrot.slane %v22, 6
  %v259 = vrot.slane %v23, 6
  %v260 = vrot.slane %v24, 6
  %v261 = vrot.slane %v25, 6
  %v262 = vrot.slane %v26, 6
  %v263 = vrot.slane %v27, 6
  %v264 = vrot.slane %v28, 6
  %v265 = vrot.slane %v29, 6
  %v266 = vrot.slane %v30, 6
  %v267 = vrot.slane %v31, 6
  %v268 = vrot.slane %v32, 6
  %vm269 = vcmp.lt.s32.totalorder %v47, 2
  %v270 = vsel %vm269, %v265, %v267
  %v271 = vsel %vm269, %v266, %v268
  %v272 = vsel %vm269, %v263, %v265
  %v273 = vsel %vm269, %v264, %v266
  %v274 = vsel %vm269, %v261, %v263
  %v275 = vsel %vm269, %v262, %v264
  %v276 = vsel %vm269, %v259, %v261
  %v277 = vsel %vm269, %v260, %v262
  %v278 = vsel %vm269, %v257, %v259
  %v279 = vsel %vm269, %v258, %v260
  %v280 = vsel %vm269, %v255, %v257
  %v281 = vsel %vm269, %v256, %v258
  %v282 = vsel %vm269, %v253, %v255
  %v283 = vsel %vm269, %v254, %v256
  %v284 = vsel %vm269, %v251, %v253
  %v285 = vsel %vm269, %v252, %v254
  %v286 = vsel %vm269, %v249, %v251
  %v287 = vsel %vm269, %v250, %v252
  %v288 = vsel %vm269, %v267, %v249
  %v289 = vsel %vm269, %v268, %v250
  %vm290 = vcmp.ge.s32.totalorder %v47, 70
  %vm291 = vcmp.ge.s32.totalorder %v48, 70
  %vm292 = vcmp.ge.s32.totalorder %v49, 70
  %vm293 = vcmp.ge.s32.totalorder %v50, 70
  %vm294 = vcmp.ge.s32.totalorder %v51, 70
  %vm295 = vcmp.ge.s32.totalorder %v52, 70
  %vm296 = vcmp.ge.s32.totalorder %v53, 70
  %vm297 = vcmp.ge.s32.totalorder %v54, 70
  %vm298 = vcmp.ge.s32.totalorder %v55, 70
  %vm299 = vcmp.ge.s32.totalorder %v56, 70
  %v300 = vsel %vm290, %v270, %v243
  %v301 = vsel %vm290, %v271, %v244
  %v302 = vsel %vm291, %v288, %v241
  %v303 = vsel %vm291, %v289, %v242
  %v304 = vsel %vm292, %v286, %v239
  %v305 = vsel %vm292, %v287, %v240
  %v306 = vsel %vm293, %v284, %v237
  %v307 = vsel %vm293, %v285, %v238
  %v308 = vsel %vm294, %v282, %v235
  %v309 = vsel %vm294, %v283, %v236
  %v310 = vsel %vm295, %v280, %v233
  %v311 = vsel %vm295, %v281, %v234
  %v312 = vsel %vm296, %v278, %v231
  %v313 = vsel %vm296, %v279, %v232
  %v314 = vsel %vm297, %v276, %v229
  %v315 = vsel %vm297, %v277, %v230
  %v316 = vsel %vm298, %v274, %v247
  %v317 = vsel %vm298, %v275, %v248
  %v318 = vsel %vm299, %v272, %v245
  %v319 = vsel %vm299, %v273, %v246
  %320 = vrot.lane.b32.xlu0 %v300, 1
  %v321 = vpop.permute.xlu0 %320
  %322 = vrot.lane.b32.xlu0 %v302, 1
  %v323 = vpop.permute.xlu0 %322
  %324 = vrot.lane.b32.xlu0 %v304, 1
  %v325 = vpop.permute.xlu0 %324
  %326 = vrot.lane.b32.xlu0 %v306, 1
  %v327 = vpop.permute.xlu0 %326
  %328 = vrot.lane.b32.xlu0 %v308, 1
  %v329 = vpop.permute.xlu0 %328
  %330 = vrot.lane.b32.xlu0 %v310, 1
  %v331 = vpop.permute.xlu0 %330
  %332 = vrot.lane.b32.xlu0 %v312, 1
  %v333 = vpop.permute.xlu0 %332
  %334 = vrot.lane.b32.xlu0 %v314, 1
  %v335 = vpop.permute.xlu0 %334
  %336 = vrot.lane.b32.xlu0 %v316, 1
  %v337 = vpop.permute.xlu0 %336
  %338 = vrot.lane.b32.xlu0 %v318, 1
  %v339 = vpop.permute.xlu0 %338
  %340 = vrot.lane.b32.xlu0 %v301, 1
  %v341 = vpop.permute.xlu0 %340
  %342 = vrot.lane.b32.xlu0 %v303, 1
  %v343 = vpop.permute.xlu0 %342
  %344 = vrot.lane.b32.xlu0 %v305, 1
  %v345 = vpop.permute.xlu0 %344
  %346 = vrot.lane.b32.xlu0 %v307, 1
  %v347 = vpop.permute.xlu0 %346
  %348 = vrot.lane.b32.xlu0 %v309, 1
  %v349 = vpop.permute.xlu0 %348
  %350 = vrot.lane.b32.xlu0 %v311, 1
  %v351 = vpop.permute.xlu0 %350
  %352 = vrot.lane.b32.xlu0 %v313, 1
  %v353 = vpop.permute.xlu0 %352
  %354 = vrot.lane.b32.xlu0 %v315, 1
  %v355 = vpop.permute.xlu0 %354
  %356 = vrot.lane.b32.xlu0 %v317, 1
  %v357 = vpop.permute.xlu0 %356
  %358 = vrot.lane.b32.xlu0 %v319, 1
  %v359 = vpop.permute.xlu0 %358
  %vm360 = vcmp.lt.s32.totalorder %v44, 1
  %v361 = vsel %vm360, %v321, %v341
  %v362 = vsel %vm360, %v323, %v343
  %v363 = vsel %vm360, %v325, %v345
  %v364 = vsel %vm360, %v327, %v347
  %v365 = vsel %vm360, %v329, %v349
  %v366 = vsel %vm360, %v331, %v351
  %v367 = vsel %vm360, %v333, %v353
  %v368 = vsel %vm360, %v335, %v355
  %v369 = vsel %vm360, %v337, %v357
  %v370 = vsel %vm360, %v339, %v359
  %v371 = vsel %vm360, %v341, %v321
  %v372 = vsel %vm360, %v343, %v323
  %v373 = vsel %vm360, %v345, %v325
  %v374 = vsel %vm360, %v347, %v327
  %v375 = vsel %vm360, %v349, %v329
  %v376 = vsel %vm360, %v351, %v331
  %v377 = vsel %vm360, %v353, %v333
  %v378 = vsel %vm360, %v355, %v335
  %v379 = vsel %vm360, %v357, %v337
  %v380 = vsel %vm360, %v359, %v339
  %v381 = vand.u32 %v33, 1
  %v382 = vand.u32 %v34, 1
  %v383 = vand.u32 %v35, 1
  %v384 = vand.u32 %v36, 1
  %v385 = vand.u32 %v37, 1
  %v386 = vand.u32 %v38, 1
  %v387 = vand.u32 %v39, 1
  %v388 = vand.u32 %v40, 1
  %v389 = vand.u32 %v41, 1
  %v390 = vand.u32 %v42, 1
  %vm391 = vcmp.ne.s32.totalorder %v381, 0
  %vm392 = vcmp.ne.s32.totalorder %v382, 0
  %vm393 = vcmp.ne.s32.totalorder %v383, 0
  %vm394 = vcmp.ne.s32.totalorder %v384, 0
  %vm395 = vcmp.ne.s32.totalorder %v385, 0
  %vm396 = vcmp.ne.s32.totalorder %v386, 0
  %vm397 = vcmp.ne.s32.totalorder %v387, 0
  %vm398 = vcmp.ne.s32.totalorder %v388, 0
  %vm399 = vcmp.ne.s32.totalorder %v389, 0
  %vm400 = vcmp.ne.s32.totalorder %v390, 0
  %v401 = vsel %vm391, 1, 0
  %v402 = vsel %vm392, 1, 0
  %v403 = vsel %vm393, 1, 0
  %v404 = vsel %vm394, 1, 0
  %v405 = vsel %vm395, 1, 0
  %v406 = vsel %vm396, 1, 0
  %v407 = vsel %vm397, 1, 0
  %v408 = vsel %vm398, 1, 0
  %v409 = vsel %vm399, 1, 0
  %v410 = vsel %vm400, 1, 0
  %411 = vset.pattern.permute.xlu0 0
  %412 = vperm.xlu0 %411, %v401
  %v413 = vpop.permute.xlu0 %412
  %414 = vset.pattern.permute.xlu0 0
  %415 = vperm.xlu0 %414, %v402
  %v416 = vpop.permute.xlu0 %415
  %417 = vset.pattern.permute.xlu0 0
  %418 = vperm.xlu0 %417, %v403
  %v419 = vpop.permute.xlu0 %418
  %420 = vset.pattern.permute.xlu0 0
  %421 = vperm.xlu0 %420, %v404
  %v422 = vpop.permute.xlu0 %421
  %423 = vset.pattern.permute.xlu0 0
  %424 = vperm.xlu0 %423, %v405
  %v425 = vpop.permute.xlu0 %424
  %426 = vset.pattern.permute.xlu0 0
  %427 = vperm.xlu0 %426, %v406
  %v428 = vpop.permute.xlu0 %427
  %429 = vset.pattern.permute.xlu0 0
  %430 = vperm.xlu0 %429, %v407
  %v431 = vpop.permute.xlu0 %430
  %432 = vset.pattern.permute.xlu0 0
  %433 = vperm.xlu0 %432, %v408
  %v434 = vpop.permute.xlu0 %433
  %435 = vset.pattern.permute.xlu0 0
  %436 = vperm.xlu0 %435, %v409
  %v437 = vpop.permute.xlu0 %436
  %438 = vset.pattern.permute.xlu0 0
  %439 = vperm.xlu0 %438, %v410
  %v440 = vpop.permute.xlu0 %439
  %vm441 = vcmp.eq.s32.totalorder %v413, 1
  %vm442 = vcmp.eq.s32.totalorder %v416, 1
  %vm443 = vcmp.eq.s32.totalorder %v419, 1
  %vm444 = vcmp.eq.s32.totalorder %v422, 1
  %vm445 = vcmp.eq.s32.totalorder %v425, 1
  %vm446 = vcmp.eq.s32.totalorder %v428, 1
  %vm447 = vcmp.eq.s32.totalorder %v431, 1
  %vm448 = vcmp.eq.s32.totalorder %v434, 1
  %vm449 = vcmp.eq.s32.totalorder %v437, 1
  %vm450 = vcmp.eq.s32.totalorder %v440, 1
  %v451 = vsel %vm441, %v371, %v300
  %v452 = vsel %vm441, %v361, %v301
  %v453 = vsel %vm442, %v372, %v302
  %v454 = vsel %vm442, %v362, %v303
  %v455 = vsel %vm443, %v373, %v304
  %v456 = vsel %vm443, %v363, %v305
  %v457 = vsel %vm444, %v374, %v306
  %v458 = vsel %vm444, %v364, %v307
  %v459 = vsel %vm445, %v375, %v308
  %v460 = vsel %vm445, %v365, %v309
  %v461 = vsel %vm446, %v376, %v310
  %v462 = vsel %vm446, %v366, %v311
  %v463 = vsel %vm447, %v377, %v312
  %v464 = vsel %vm447, %v367, %v313
  %v465 = vsel %vm448, %v378, %v314
  %v466 = vsel %vm448, %v368, %v315
  %v467 = vsel %vm449, %v379, %v316
  %v468 = vsel %vm449, %v369, %v317
  %v469 = vsel %vm450, %v380, %v318
  %v470 = vsel %vm450, %v370, %v319
  %471 = vrot.lane.b32.xlu0 %v451, 2
  %v472 = vpop.permute.xlu0 %471
  %473 = vrot.lane.b32.xlu0 %v453, 2
  %v474 = vpop.permute.xlu0 %473
  %475 = vrot.lane.b32.xlu0 %v455, 2
  %v476 = vpop.permute.xlu0 %475
  %477 = vrot.lane.b32.xlu0 %v457, 2
  %v478 = vpop.permute.xlu0 %477
  %479 = vrot.lane.b32.xlu0 %v459, 2
  %v480 = vpop.permute.xlu0 %479
  %481 = vrot.lane.b32.xlu0 %v461, 2
  %v482 = vpop.permute.xlu0 %481
  %483 = vrot.lane.b32.xlu0 %v463, 2
  %v484 = vpop.permute.xlu0 %483
  %485 = vrot.lane.b32.xlu0 %v465, 2
  %v486 = vpop.permute.xlu0 %485
  %487 = vrot.lane.b32.xlu0 %v467, 2
  %v488 = vpop.permute.xlu0 %487
  %489 = vrot.lane.b32.xlu0 %v469, 2
  %v490 = vpop.permute.xlu0 %489
  %491 = vrot.lane.b32.xlu0 %v452, 2
  %v492 = vpop.permute.xlu0 %491
  %493 = vrot.lane.b32.xlu0 %v454, 2
  %v494 = vpop.permute.xlu0 %493
  %495 = vrot.lane.b32.xlu0 %v456, 2
  %v496 = vpop.permute.xlu0 %495
  %497 = vrot.lane.b32.xlu0 %v458, 2
  %v498 = vpop.permute.xlu0 %497
  %499 = vrot.lane.b32.xlu0 %v460, 2
  %v500 = vpop.permute.xlu0 %499
  %501 = vrot.lane.b32.xlu0 %v462, 2
  %v502 = vpop.permute.xlu0 %501
  %503 = vrot.lane.b32.xlu0 %v464, 2
  %v504 = vpop.permute.xlu0 %503
  %505 = vrot.lane.b32.xlu0 %v466, 2
  %v506 = vpop.permute.xlu0 %505
  %507 = vrot.lane.b32.xlu0 %v468, 2
  %v508 = vpop.permute.xlu0 %507
  %509 = vrot.lane.b32.xlu0 %v470, 2
  %v510 = vpop.permute.xlu0 %509
  %vm511 = vcmp.lt.s32.totalorder %v44, 2
  %v512 = vsel %vm511, %v472, %v492
  %v513 = vsel %vm511, %v474, %v494
  %v514 = vsel %vm511, %v476, %v496
  %v515 = vsel %vm511, %v478, %v498
  %v516 = vsel %vm511, %v480, %v500
  %v517 = vsel %vm511, %v482, %v502
  %v518 = vsel %vm511, %v484, %v504
  %v519 = vsel %vm511, %v486, %v506
  %v520 = vsel %vm511, %v488, %v508
  %v521 = vsel %vm511, %v490, %v510
  %v522 = vsel %vm511, %v492, %v472
  %v523 = vsel %vm511, %v494, %v474
  %v524 = vsel %vm511, %v496, %v476
  %v525 = vsel %vm511, %v498, %v478
  %v526 = vsel %vm511, %v500, %v480
  %v527 = vsel %vm511, %v502, %v482
  %v528 = vsel %vm511, %v504, %v484
  %v529 = vsel %vm511, %v506, %v486
  %v530 = vsel %vm511, %v508, %v488
  %v531 = vsel %vm511, %v510, %v490
  %v532 = vand.u32 %v33, 2
  %v533 = vand.u32 %v34, 2
  %v534 = vand.u32 %v35, 2
  %v535 = vand.u32 %v36, 2
  %v536 = vand.u32 %v37, 2
  %v537 = vand.u32 %v38, 2
  %v538 = vand.u32 %v39, 2
  %v539 = vand.u32 %v40, 2
  %v540 = vand.u32 %v41, 2
  %v541 = vand.u32 %v42, 2
  %vm542 = vcmp.ne.s32.totalorder %v532, 0
  %vm543 = vcmp.ne.s32.totalorder %v533, 0
  %vm544 = vcmp.ne.s32.totalorder %v534, 0
  %vm545 = vcmp.ne.s32.totalorder %v535, 0
  %vm546 = vcmp.ne.s32.totalorder %v536, 0
  %vm547 = vcmp.ne.s32.totalorder %v537, 0
  %vm548 = vcmp.ne.s32.totalorder %v538, 0
  %vm549 = vcmp.ne.s32.totalorder %v539, 0
  %vm550 = vcmp.ne.s32.totalorder %v540, 0
  %vm551 = vcmp.ne.s32.totalorder %v541, 0
  %v552 = vsel %vm542, 1, 0
  %v553 = vsel %vm543, 1, 0
  %v554 = vsel %vm544, 1, 0
  %v555 = vsel %vm545, 1, 0
  %v556 = vsel %vm546, 1, 0
  %v557 = vsel %vm547, 1, 0
  %v558 = vsel %vm548, 1, 0
  %v559 = vsel %vm549, 1, 0
  %v560 = vsel %vm550, 1, 0
  %v561 = vsel %vm551, 1, 0
  %562 = vset.pattern.permute.xlu0 0
  %563 = vperm.xlu0 %562, %v552
  %v564 = vpop.permute.xlu0 %563
  %565 = vset.pattern.permute.xlu0 0
  %566 = vperm.xlu0 %565, %v553
  %v567 = vpop.permute.xlu0 %566
  %568 = vset.pattern.permute.xlu0 0
  %569 = vperm.xlu0 %568, %v554
  %v570 = vpop.permute.xlu0 %569
  %571 = vset.pattern.permute.xlu0 0
  %572 = vperm.xlu0 %571, %v555
  %v573 = vpop.permute.xlu0 %572
  %574 = vset.pattern.permute.xlu0 0
  %575 = vperm.xlu0 %574, %v556
  %v576 = vpop.permute.xlu0 %575
  %577 = vset.pattern.permute.xlu0 0
  %578 = vperm.xlu0 %577, %v557
  %v579 = vpop.permute.xlu0 %578
  %580 = vset.pattern.permute.xlu0 0
  %581 = vperm.xlu0 %580, %v558
  %v582 = vpop.permute.xlu0 %581
  %583 = vset.pattern.permute.xlu0 0
  %584 = vperm.xlu0 %583, %v559
  %v585 = vpop.permute.xlu0 %584
  %586 = vset.pattern.permute.xlu0 0
  %587 = vperm.xlu0 %586, %v560
  %v588 = vpop.permute.xlu0 %587
  %589 = vset.pattern.permute.xlu0 0
  %590 = vperm.xlu0 %589, %v561
  %v591 = vpop.permute.xlu0 %590
  %vm592 = vcmp.eq.s32.totalorder %v564, 1
  %vm593 = vcmp.eq.s32.totalorder %v567, 1
  %vm594 = vcmp.eq.s32.totalorder %v570, 1
  %vm595 = vcmp.eq.s32.totalorder %v573, 1
  %vm596 = vcmp.eq.s32.totalorder %v576, 1
  %vm597 = vcmp.eq.s32.totalorder %v579, 1
  %vm598 = vcmp.eq.s32.totalorder %v582, 1
  %vm599 = vcmp.eq.s32.totalorder %v585, 1
  %vm600 = vcmp.eq.s32.totalorder %v588, 1
  %vm601 = vcmp.eq.s32.totalorder %v591, 1
  %v602 = vsel %vm592, %v522, %v451
  %v603 = vsel %vm592, %v512, %v452
  %v604 = vsel %vm593, %v523, %v453
  %v605 = vsel %vm593, %v513, %v454
  %v606 = vsel %vm594, %v524, %v455
  %v607 = vsel %vm594, %v514, %v456
  %v608 = vsel %vm595, %v525, %v457
  %v609 = vsel %vm595, %v515, %v458
  %v610 = vsel %vm596, %v526, %v459
  %v611 = vsel %vm596, %v516, %v460
  %v612 = vsel %vm597, %v527, %v461
  %v613 = vsel %vm597, %v517, %v462
  %v614 = vsel %vm598, %v528, %v463
  %v615 = vsel %vm598, %v518, %v464
  %v616 = vsel %vm599, %v529, %v465
  %v617 = vsel %vm599, %v519, %v466
  %v618 = vsel %vm600, %v530, %v467
  %v619 = vsel %vm600, %v520, %v468
  %v620 = vsel %vm601, %v531, %v469
  %v621 = vsel %vm601, %v521, %v470
  %622 = vrot.lane.b32.xlu0 %v602, 4
  %v623 = vpop.permute.xlu0 %622
  %624 = vrot.lane.b32.xlu0 %v604, 4
  %v625 = vpop.permute.xlu0 %624
  %626 = vrot.lane.b32.xlu0 %v606, 4
  %v627 = vpop.permute.xlu0 %626
  %628 = vrot.lane.b32.xlu0 %v608, 4
  %v629 = vpop.permute.xlu0 %628
  %630 = vrot.lane.b32.xlu0 %v610, 4
  %v631 = vpop.permute.xlu0 %630
  %632 = vrot.lane.b32.xlu0 %v612, 4
  %v633 = vpop.permute.xlu0 %632
  %634 = vrot.lane.b32.xlu0 %v614, 4
  %v635 = vpop.permute.xlu0 %634
  %636 = vrot.lane.b32.xlu0 %v616, 4
  %v637 = vpop.permute.xlu0 %636
  %638 = vrot.lane.b32.xlu0 %v618, 4
  %v639 = vpop.permute.xlu0 %638
  %640 = vrot.lane.b32.xlu0 %v620, 4
  %v641 = vpop.permute.xlu0 %640
  %642 = vrot.lane.b32.xlu0 %v603, 4
  %v643 = vpop.permute.xlu0 %642
  %644 = vrot.lane.b32.xlu0 %v605, 4
  %v645 = vpop.permute.xlu0 %644
  %646 = vrot.lane.b32.xlu0 %v607, 4
  %v647 = vpop.permute.xlu0 %646
  %648 = vrot.lane.b32.xlu0 %v609, 4
  %v649 = vpop.permute.xlu0 %648
  %650 = vrot.lane.b32.xlu0 %v611, 4
  %v651 = vpop.permute.xlu0 %650
  %652 = vrot.lane.b32.xlu0 %v613, 4
  %v653 = vpop.permute.xlu0 %652
  %654 = vrot.lane.b32.xlu0 %v615, 4
  %v655 = vpop.permute.xlu0 %654
  %656 = vrot.lane.b32.xlu0 %v617, 4
  %v657 = vpop.permute.xlu0 %656
  %658 = vrot.lane.b32.xlu0 %v619, 4
  %v659 = vpop.permute.xlu0 %658
  %660 = vrot.lane.b32.xlu0 %v621, 4
  %v661 = vpop.permute.xlu0 %660
  %vm662 = vcmp.lt.s32.totalorder %v44, 4
  %v663 = vsel %vm662, %v623, %v643
  %v664 = vsel %vm662, %v625, %v645
  %v665 = vsel %vm662, %v627, %v647
  %v666 = vsel %vm662, %v629, %v649
  %v667 = vsel %vm662, %v631, %v651
  %v668 = vsel %vm662, %v633, %v653
  %v669 = vsel %vm662, %v635, %v655
  %v670 = vsel %vm662, %v637, %v657
  %v671 = vsel %vm662, %v639, %v659
  %v672 = vsel %vm662, %v641, %v661
  %v673 = vsel %vm662, %v643, %v623
  %v674 = vsel %vm662, %v645, %v625
  %v675 = vsel %vm662, %v647, %v627
  %v676 = vsel %vm662, %v649, %v629
  %v677 = vsel %vm662, %v651, %v631
  %v678 = vsel %vm662, %v653, %v633
  %v679 = vsel %vm662, %v655, %v635
  %v680 = vsel %vm662, %v657, %v637
  %v681 = vsel %vm662, %v659, %v639
  %v682 = vsel %vm662, %v661, %v641
  %v683 = vand.u32 %v33, 4
  %v684 = vand.u32 %v34, 4
  %v685 = vand.u32 %v35, 4
  %v686 = vand.u32 %v36, 4
  %v687 = vand.u32 %v37, 4
  %v688 = vand.u32 %v38, 4
  %v689 = vand.u32 %v39, 4
  %v690 = vand.u32 %v40, 4
  %v691 = vand.u32 %v41, 4
  %v692 = vand.u32 %v42, 4
  %vm693 = vcmp.ne.s32.totalorder %v683, 0
  %vm694 = vcmp.ne.s32.totalorder %v684, 0
  %vm695 = vcmp.ne.s32.totalorder %v685, 0
  %vm696 = vcmp.ne.s32.totalorder %v686, 0
  %vm697 = vcmp.ne.s32.totalorder %v687, 0
  %vm698 = vcmp.ne.s32.totalorder %v688, 0
  %vm699 = vcmp.ne.s32.totalorder %v689, 0
  %vm700 = vcmp.ne.s32.totalorder %v690, 0
  %vm701 = vcmp.ne.s32.totalorder %v691, 0
  %vm702 = vcmp.ne.s32.totalorder %v692, 0
  %v703 = vsel %vm693, 1, 0
  %v704 = vsel %vm694, 1, 0
  %v705 = vsel %vm695, 1, 0
  %v706 = vsel %vm696, 1, 0
  %v707 = vsel %vm697, 1, 0
  %v708 = vsel %vm698, 1, 0
  %v709 = vsel %vm699, 1, 0
  %v710 = vsel %vm700, 1, 0
  %v711 = vsel %vm701, 1, 0
  %v712 = vsel %vm702, 1, 0
  %713 = vset.pattern.permute.xlu0 0
  %714 = vperm.xlu0 %713, %v703
  %v715 = vpop.permute.xlu0 %714
  %716 = vset.pattern.permute.xlu0 0
  %717 = vperm.xlu0 %716, %v704
  %v718 = vpop.permute.xlu0 %717
  %719 = vset.pattern.permute.xlu0 0
  %720 = vperm.xlu0 %719, %v705
  %v721 = vpop.permute.xlu0 %720
  %722 = vset.pattern.permute.xlu0 0
  %723 = vperm.xlu0 %722, %v706
  %v724 = vpop.permute.xlu0 %723
  %725 = vset.pattern.permute.xlu0 0
  %726 = vperm.xlu0 %725, %v707
  %v727 = vpop.permute.xlu0 %726
  %728 = vset.pattern.permute.xlu0 0
  %729 = vperm.xlu0 %728, %v708
  %v730 = vpop.permute.xlu0 %729
  %731 = vset.pattern.permute.xlu0 0
  %732 = vperm.xlu0 %731, %v709
  %v733 = vpop.permute.xlu0 %732
  %734 = vset.pattern.permute.xlu0 0
  %735 = vperm.xlu0 %734, %v710
  %v736 = vpop.permute.xlu0 %735
  %737 = vset.pattern.permute.xlu0 0
  %738 = vperm.xlu0 %737, %v711
  %v739 = vpop.permute.xlu0 %738
  %740 = vset.pattern.permute.xlu0 0
  %741 = vperm.xlu0 %740, %v712
  %v742 = vpop.permute.xlu0 %741
  %vm743 = vcmp.eq.s32.totalorder %v715, 1
  %vm744 = vcmp.eq.s32.totalorder %v718, 1
  %vm745 = vcmp.eq.s32.totalorder %v721, 1
  %vm746 = vcmp.eq.s32.totalorder %v724, 1
  %vm747 = vcmp.eq.s32.totalorder %v727, 1
  %vm748 = vcmp.eq.s32.totalorder %v730, 1
  %vm749 = vcmp.eq.s32.totalorder %v733, 1
  %vm750 = vcmp.eq.s32.totalorder %v736, 1
  %vm751 = vcmp.eq.s32.totalorder %v739, 1
  %vm752 = vcmp.eq.s32.totalorder %v742, 1
  %v753 = vsel %vm743, %v673, %v602
  %v754 = vsel %vm743, %v663, %v603
  %v755 = vsel %vm744, %v674, %v604
  %v756 = vsel %vm744, %v664, %v605
  %v757 = vsel %vm745, %v675, %v606
  %v758 = vsel %vm745, %v665, %v607
  %v759 = vsel %vm746, %v676, %v608
  %v760 = vsel %vm746, %v666, %v609
  %v761 = vsel %vm747, %v677, %v610
  %v762 = vsel %vm747, %v667, %v611
  %v763 = vsel %vm748, %v678, %v612
  %v764 = vsel %vm748, %v668, %v613
  %v765 = vsel %vm749, %v679, %v614
  %v766 = vsel %vm749, %v669, %v615
  %v767 = vsel %vm750, %v680, %v616
  %v768 = vsel %vm750, %v670, %v617
  %v769 = vsel %vm751, %v681, %v618
  %v770 = vsel %vm751, %v671, %v619
  %v771 = vsel %vm752, %v682, %v620
  %v772 = vsel %vm752, %v672, %v621
  %773 = vrot.lane.b32.xlu0 %v753, 8
  %v774 = vpop.permute.xlu0 %773
  %775 = vrot.lane.b32.xlu0 %v755, 8
  %v776 = vpop.permute.xlu0 %775
  %777 = vrot.lane.b32.xlu0 %v757, 8
  %v778 = vpop.permute.xlu0 %777
  %779 = vrot.lane.b32.xlu0 %v759, 8
  %v780 = vpop.permute.xlu0 %779
  %781 = vrot.lane.b32.xlu0 %v761, 8
  %v782 = vpop.permute.xlu0 %781
  %783 = vrot.lane.b32.xlu0 %v763, 8
  %v784 = vpop.permute.xlu0 %783
  %785 = vrot.lane.b32.xlu0 %v765, 8
  %v786 = vpop.permute.xlu0 %785
  %787 = vrot.lane.b32.xlu0 %v767, 8
  %v788 = vpop.permute.xlu0 %787
  %789 = vrot.lane.b32.xlu0 %v769, 8
  %v790 = vpop.permute.xlu0 %789
  %791 = vrot.lane.b32.xlu0 %v771, 8
  %v792 = vpop.permute.xlu0 %791
  %793 = vrot.lane.b32.xlu0 %v754, 8
  %v794 = vpop.permute.xlu0 %793
  %795 = vrot.lane.b32.xlu0 %v756, 8
  %v796 = vpop.permute.xlu0 %795
  %797 = vrot.lane.b32.xlu0 %v758, 8
  %v798 = vpop.permute.xlu0 %797
  %799 = vrot.lane.b32.xlu0 %v760, 8
  %v800 = vpop.permute.xlu0 %799
  %801 = vrot.lane.b32.xlu0 %v762, 8
  %v802 = vpop.permute.xlu0 %801
  %803 = vrot.lane.b32.xlu0 %v764, 8
  %v804 = vpop.permute.xlu0 %803
  %805 = vrot.lane.b32.xlu0 %v766, 8
  %v806 = vpop.permute.xlu0 %805
  %807 = vrot.lane.b32.xlu0 %v768, 8
  %v808 = vpop.permute.xlu0 %807
  %809 = vrot.lane.b32.xlu0 %v770, 8
  %v810 = vpop.permute.xlu0 %809
  %811 = vrot.lane.b32.xlu0 %v772, 8
  %v812 = vpop.permute.xlu0 %811
  %vm813 = vcmp.lt.s32.totalorder %v44, 8
  %v814 = vsel %vm813, %v774, %v794
  %v815 = vsel %vm813, %v776, %v796
  %v816 = vsel %vm813, %v778, %v798
  %v817 = vsel %vm813, %v780, %v800
  %v818 = vsel %vm813, %v782, %v802
  %v819 = vsel %vm813, %v784, %v804
  %v820 = vsel %vm813, %v786, %v806
  %v821 = vsel %vm813, %v788, %v808
  %v822 = vsel %vm813, %v790, %v810
  %v823 = vsel %vm813, %v792, %v812
  %v824 = vsel %vm813, %v794, %v774
  %v825 = vsel %vm813, %v796, %v776
  %v826 = vsel %vm813, %v798, %v778
  %v827 = vsel %vm813, %v800, %v780
  %v828 = vsel %vm813, %v802, %v782
  %v829 = vsel %vm813, %v804, %v784
  %v830 = vsel %vm813, %v806, %v786
  %v831 = vsel %vm813, %v808, %v788
  %v832 = vsel %vm813, %v810, %v790
  %v833 = vsel %vm813, %v812, %v792
  %v834 = vand.u32 %v33, 8
  %v835 = vand.u32 %v34, 8
  %v836 = vand.u32 %v35, 8
  %v837 = vand.u32 %v36, 8
  %v838 = vand.u32 %v37, 8
  %v839 = vand.u32 %v38, 8
  %v840 = vand.u32 %v39, 8
  %v841 = vand.u32 %v40, 8
  %v842 = vand.u32 %v41, 8
  %v843 = vand.u32 %v42, 8
  %vm844 = vcmp.ne.s32.totalorder %v834, 0
  %vm845 = vcmp.ne.s32.totalorder %v835, 0
  %vm846 = vcmp.ne.s32.totalorder %v836, 0
  %vm847 = vcmp.ne.s32.totalorder %v837, 0
  %vm848 = vcmp.ne.s32.totalorder %v838, 0
  %vm849 = vcmp.ne.s32.totalorder %v839, 0
  %vm850 = vcmp.ne.s32.totalorder %v840, 0
  %vm851 = vcmp.ne.s32.totalorder %v841, 0
  %vm852 = vcmp.ne.s32.totalorder %v842, 0
  %vm853 = vcmp.ne.s32.totalorder %v843, 0
  %v854 = vsel %vm844, 1, 0
  %v855 = vsel %vm845, 1, 0
  %v856 = vsel %vm846, 1, 0
  %v857 = vsel %vm847, 1, 0
  %v858 = vsel %vm848, 1, 0
  %v859 = vsel %vm849, 1, 0
  %v860 = vsel %vm850, 1, 0
  %v861 = vsel %vm851, 1, 0
  %v862 = vsel %vm852, 1, 0
  %v863 = vsel %vm853, 1, 0
  %864 = vset.pattern.permute.xlu0 0
  %865 = vperm.xlu0 %864, %v854
  %v866 = vpop.permute.xlu0 %865
  %867 = vset.pattern.permute.xlu0 0
  %868 = vperm.xlu0 %867, %v855
  %v869 = vpop.permute.xlu0 %868
  %870 = vset.pattern.permute.xlu0 0
  %871 = vperm.xlu0 %870, %v856
  %v872 = vpop.permute.xlu0 %871
  %873 = vset.pattern.permute.xlu0 0
  %874 = vperm.xlu0 %873, %v857
  %v875 = vpop.permute.xlu0 %874
  %876 = vset.pattern.permute.xlu0 0
  %877 = vperm.xlu0 %876, %v858
  %v878 = vpop.permute.xlu0 %877
  %879 = vset.pattern.permute.xlu0 0
  %880 = vperm.xlu0 %879, %v859
  %v881 = vpop.permute.xlu0 %880
  %882 = vset.pattern.permute.xlu0 0
  %883 = vperm.xlu0 %882, %v860
  %v884 = vpop.permute.xlu0 %883
  %885 = vset.pattern.permute.xlu0 0
  %886 = vperm.xlu0 %885, %v861
  %v887 = vpop.permute.xlu0 %886
  %888 = vset.pattern.permute.xlu0 0
  %889 = vperm.xlu0 %888, %v862
  %v890 = vpop.permute.xlu0 %889
  %891 = vset.pattern.permute.xlu0 0
  %892 = vperm.xlu0 %891, %v863
  %v893 = vpop.permute.xlu0 %892
  %vm894 = vcmp.eq.s32.totalorder %v866, 1
  %vm895 = vcmp.eq.s32.totalorder %v869, 1
  %vm896 = vcmp.eq.s32.totalorder %v872, 1
  %vm897 = vcmp.eq.s32.totalorder %v875, 1
  %vm898 = vcmp.eq.s32.totalorder %v878, 1
  %vm899 = vcmp.eq.s32.totalorder %v881, 1
  %vm900 = vcmp.eq.s32.totalorder %v884, 1
  %vm901 = vcmp.eq.s32.totalorder %v887, 1
  %vm902 = vcmp.eq.s32.totalorder %v890, 1
  %vm903 = vcmp.eq.s32.totalorder %v893, 1
  %v904 = vsel %vm894, %v824, %v753
  %v905 = vsel %vm894, %v814, %v754
  %v906 = vsel %vm895, %v825, %v755
  %v907 = vsel %vm895, %v815, %v756
  %v908 = vsel %vm896, %v826, %v757
  %v909 = vsel %vm896, %v816, %v758
  %v910 = vsel %vm897, %v827, %v759
  %v911 = vsel %vm897, %v817, %v760
  %v912 = vsel %vm898, %v828, %v761
  %v913 = vsel %vm898, %v818, %v762
  %v914 = vsel %vm899, %v829, %v763
  %v915 = vsel %vm899, %v819, %v764
  %v916 = vsel %vm900, %v830, %v765
  %v917 = vsel %vm900, %v820, %v766
  %v918 = vsel %vm901, %v831, %v767
  %v919 = vsel %vm901, %v821, %v768
  %v920 = vsel %vm902, %v832, %v769
  %v921 = vsel %vm902, %v822, %v770
  %v922 = vsel %vm903, %v833, %v771
  %v923 = vsel %vm903, %v823, %v772
  %924 = vrot.lane.b32.xlu0 %v904, 16
  %v925 = vpop.permute.xlu0 %924
  %926 = vrot.lane.b32.xlu0 %v906, 16
  %v927 = vpop.permute.xlu0 %926
  %928 = vrot.lane.b32.xlu0 %v908, 16
  %v929 = vpop.permute.xlu0 %928
  %930 = vrot.lane.b32.xlu0 %v910, 16
  %v931 = vpop.permute.xlu0 %930
  %932 = vrot.lane.b32.xlu0 %v912, 16
  %v933 = vpop.permute.xlu0 %932
  %934 = vrot.lane.b32.xlu0 %v914, 16
  %v935 = vpop.permute.xlu0 %934
  %936 = vrot.lane.b32.xlu0 %v916, 16
  %v937 = vpop.permute.xlu0 %936
  %938 = vrot.lane.b32.xlu0 %v918, 16
  %v939 = vpop.permute.xlu0 %938
  %940 = vrot.lane.b32.xlu0 %v920, 16
  %v941 = vpop.permute.xlu0 %940
  %942 = vrot.lane.b32.xlu0 %v922, 16
  %v943 = vpop.permute.xlu0 %942
  %944 = vrot.lane.b32.xlu0 %v905, 16
  %v945 = vpop.permute.xlu0 %944
  %946 = vrot.lane.b32.xlu0 %v907, 16
  %v947 = vpop.permute.xlu0 %946
  %948 = vrot.lane.b32.xlu0 %v909, 16
  %v949 = vpop.permute.xlu0 %948
  %950 = vrot.lane.b32.xlu0 %v911, 16
  %v951 = vpop.permute.xlu0 %950
  %952 = vrot.lane.b32.xlu0 %v913, 16
  %v953 = vpop.permute.xlu0 %952
  %954 = vrot.lane.b32.xlu0 %v915, 16
  %v955 = vpop.permute.xlu0 %954
  %956 = vrot.lane.b32.xlu0 %v917, 16
  %v957 = vpop.permute.xlu0 %956
  %958 = vrot.lane.b32.xlu0 %v919, 16
  %v959 = vpop.permute.xlu0 %958
  %960 = vrot.lane.b32.xlu0 %v921, 16
  %v961 = vpop.permute.xlu0 %960
  %962 = vrot.lane.b32.xlu0 %v923, 16
  %v963 = vpop.permute.xlu0 %962
  %vm964 = vcmp.lt.s32.totalorder %v44, 16
  %v965 = vsel %vm964, %v925, %v945
  %v966 = vsel %vm964, %v927, %v947
  %v967 = vsel %vm964, %v929, %v949
  %v968 = vsel %vm964, %v931, %v951
  %v969 = vsel %vm964, %v933, %v953
  %v970 = vsel %vm964, %v935, %v955
  %v971 = vsel %vm964, %v937, %v957
  %v972 = vsel %vm964, %v939, %v959
  %v973 = vsel %vm964, %v941, %v961
  %v974 = vsel %vm964, %v943, %v963
  %v975 = vsel %vm964, %v945, %v925
  %v976 = vsel %vm964, %v947, %v927
  %v977 = vsel %vm964, %v949, %v929
  %v978 = vsel %vm964, %v951, %v931
  %v979 = vsel %vm964, %v953, %v933
  %v980 = vsel %vm964, %v955, %v935
  %v981 = vsel %vm964, %v957, %v937
  %v982 = vsel %vm964, %v959, %v939
  %v983 = vsel %vm964, %v961, %v941
  %v984 = vsel %vm964, %v963, %v943
  %v985 = vand.u32 %v33, 16
  %v986 = vand.u32 %v34, 16
  %v987 = vand.u32 %v35, 16
  %v988 = vand.u32 %v36, 16
  %v989 = vand.u32 %v37, 16
  %v990 = vand.u32 %v38, 16
  %v991 = vand.u32 %v39, 16
  %v992 = vand.u32 %v40, 16
  %v993 = vand.u32 %v41, 16
  %v994 = vand.u32 %v42, 16
  %vm995 = vcmp.ne.s32.totalorder %v985, 0
  %vm996 = vcmp.ne.s32.totalorder %v986, 0
  %vm997 = vcmp.ne.s32.totalorder %v987, 0
  %vm998 = vcmp.ne.s32.totalorder %v988, 0
  %vm999 = vcmp.ne.s32.totalorder %v989, 0
  %vm1000 = vcmp.ne.s32.totalorder %v990, 0
  %vm1001 = vcmp.ne.s32.totalorder %v991, 0
  %vm1002 = vcmp.ne.s32.totalorder %v992, 0
  %vm1003 = vcmp.ne.s32.totalorder %v993, 0
  %vm1004 = vcmp.ne.s32.totalorder %v994, 0
  %v1005 = vsel %vm995, 1, 0
  %v1006 = vsel %vm996, 1, 0
  %v1007 = vsel %vm997, 1, 0
  %v1008 = vsel %vm998, 1, 0
  %v1009 = vsel %vm999, 1, 0
  %v1010 = vsel %vm1000, 1, 0
  %v1011 = vsel %vm1001, 1, 0
  %v1012 = vsel %vm1002, 1, 0
  %v1013 = vsel %vm1003, 1, 0
  %v1014 = vsel %vm1004, 1, 0
  %1015 = vset.pattern.permute.xlu0 0
  %1016 = vperm.xlu0 %1015, %v1005
  %v1017 = vpop.permute.xlu0 %1016
  %1018 = vset.pattern.permute.xlu0 0
  %1019 = vperm.xlu0 %1018, %v1006
  %v1020 = vpop.permute.xlu0 %1019
  %1021 = vset.pattern.permute.xlu0 0
  %1022 = vperm.xlu0 %1021, %v1007
  %v1023 = vpop.permute.xlu0 %1022
  %1024 = vset.pattern.permute.xlu0 0
  %1025 = vperm.xlu0 %1024, %v1008
  %v1026 = vpop.permute.xlu0 %1025
  %1027 = vset.pattern.permute.xlu0 0
  %1028 = vperm.xlu0 %1027, %v1009
  %v1029 = vpop.permute.xlu0 %1028
  %1030 = vset.pattern.permute.xlu0 0
  %1031 = vperm.xlu0 %1030, %v1010
  %v1032 = vpop.permute.xlu0 %1031
  %1033 = vset.pattern.permute.xlu0 0
  %1034 = vperm.xlu0 %1033, %v1011
  %v1035 = vpop.permute.xlu0 %1034
  %1036 = vset.pattern.permute.xlu0 0
  %1037 = vperm.xlu0 %1036, %v1012
  %v1038 = vpop.permute.xlu0 %1037
  %1039 = vset.pattern.permute.xlu0 0
  %1040 = vperm.xlu0 %1039, %v1013
  %v1041 = vpop.permute.xlu0 %1040
  %1042 = vset.pattern.permute.xlu0 0
  %1043 = vperm.xlu0 %1042, %v1014
  %v1044 = vpop.permute.xlu0 %1043
  %vm1045 = vcmp.eq.s32.totalorder %v1017, 1
  %vm1046 = vcmp.eq.s32.totalorder %v1020, 1
  %vm1047 = vcmp.eq.s32.totalorder %v1023, 1
  %vm1048 = vcmp.eq.s32.totalorder %v1026, 1
  %vm1049 = vcmp.eq.s32.totalorder %v1029, 1
  %vm1050 = vcmp.eq.s32.totalorder %v1032, 1
  %vm1051 = vcmp.eq.s32.totalorder %v1035, 1
  %vm1052 = vcmp.eq.s32.totalorder %v1038, 1
  %vm1053 = vcmp.eq.s32.totalorder %v1041, 1
  %vm1054 = vcmp.eq.s32.totalorder %v1044, 1
  %v1055 = vsel %vm1045, %v975, %v904
  %v1056 = vsel %vm1045, %v965, %v905
  %v1057 = vsel %vm1046, %v976, %v906
  %v1058 = vsel %vm1046, %v966, %v907
  %v1059 = vsel %vm1047, %v977, %v908
  %v1060 = vsel %vm1047, %v967, %v909
  %v1061 = vsel %vm1048, %v978, %v910
  %v1062 = vsel %vm1048, %v968, %v911
  %v1063 = vsel %vm1049, %v979, %v912
  %v1064 = vsel %vm1049, %v969, %v913
  %v1065 = vsel %vm1050, %v980, %v914
  %v1066 = vsel %vm1050, %v970, %v915
  %v1067 = vsel %vm1051, %v981, %v916
  %v1068 = vsel %vm1051, %v971, %v917
  %v1069 = vsel %vm1052, %v982, %v918
  %v1070 = vsel %vm1052, %v972, %v919
  %v1071 = vsel %vm1053, %v983, %v920
  %v1072 = vsel %vm1053, %v973, %v921
  %v1073 = vsel %vm1054, %v984, %v922
  %v1074 = vsel %vm1054, %v974, %v923
  %1075 = vrot.lane.b32.xlu0 %v1055, 32
  %v1076 = vpop.permute.xlu0 %1075
  %1077 = vrot.lane.b32.xlu0 %v1057, 32
  %v1078 = vpop.permute.xlu0 %1077
  %1079 = vrot.lane.b32.xlu0 %v1059, 32
  %v1080 = vpop.permute.xlu0 %1079
  %1081 = vrot.lane.b32.xlu0 %v1061, 32
  %v1082 = vpop.permute.xlu0 %1081
  %1083 = vrot.lane.b32.xlu0 %v1063, 32
  %v1084 = vpop.permute.xlu0 %1083
  %1085 = vrot.lane.b32.xlu0 %v1065, 32
  %v1086 = vpop.permute.xlu0 %1085
  %1087 = vrot.lane.b32.xlu0 %v1067, 32
  %v1088 = vpop.permute.xlu0 %1087
  %1089 = vrot.lane.b32.xlu0 %v1069, 32
  %v1090 = vpop.permute.xlu0 %1089
  %1091 = vrot.lane.b32.xlu0 %v1071, 32
  %v1092 = vpop.permute.xlu0 %1091
  %1093 = vrot.lane.b32.xlu0 %v1073, 32
  %v1094 = vpop.permute.xlu0 %1093
  %1095 = vrot.lane.b32.xlu0 %v1056, 32
  %v1096 = vpop.permute.xlu0 %1095
  %1097 = vrot.lane.b32.xlu0 %v1058, 32
  %v1098 = vpop.permute.xlu0 %1097
  %1099 = vrot.lane.b32.xlu0 %v1060, 32
  %v1100 = vpop.permute.xlu0 %1099
  %1101 = vrot.lane.b32.xlu0 %v1062, 32
  %v1102 = vpop.permute.xlu0 %1101
  %1103 = vrot.lane.b32.xlu0 %v1064, 32
  %v1104 = vpop.permute.xlu0 %1103
  %1105 = vrot.lane.b32.xlu0 %v1066, 32
  %v1106 = vpop.permute.xlu0 %1105
  %1107 = vrot.lane.b32.xlu0 %v1068, 32
  %v1108 = vpop.permute.xlu0 %1107
  %1109 = vrot.lane.b32.xlu0 %v1070, 32
  %v1110 = vpop.permute.xlu0 %1109
  %1111 = vrot.lane.b32.xlu0 %v1072, 32
  %v1112 = vpop.permute.xlu0 %1111
  %1113 = vrot.lane.b32.xlu0 %v1074, 32
  %v1114 = vpop.permute.xlu0 %1113
  %vm1115 = vcmp.lt.s32.totalorder %v44, 32
  %v1116 = vsel %vm1115, %v1076, %v1096
  %v1117 = vsel %vm1115, %v1078, %v1098
  %v1118 = vsel %vm1115, %v1080, %v1100
  %v1119 = vsel %vm1115, %v1082, %v1102
  %v1120 = vsel %vm1115, %v1084, %v1104
  %v1121 = vsel %vm1115, %v1086, %v1106
  %v1122 = vsel %vm1115, %v1088, %v1108
  %v1123 = vsel %vm1115, %v1090, %v1110
  %v1124 = vsel %vm1115, %v1092, %v1112
  %v1125 = vsel %vm1115, %v1094, %v1114
  %v1126 = vsel %vm1115, %v1096, %v1076
  %v1127 = vsel %vm1115, %v1098, %v1078
  %v1128 = vsel %vm1115, %v1100, %v1080
  %v1129 = vsel %vm1115, %v1102, %v1082
  %v1130 = vsel %vm1115, %v1104, %v1084
  %v1131 = vsel %vm1115, %v1106, %v1086
  %v1132 = vsel %vm1115, %v1108, %v1088
  %v1133 = vsel %vm1115, %v1110, %v1090
  %v1134 = vsel %vm1115, %v1112, %v1092
  %v1135 = vsel %vm1115, %v1114, %v1094
  %v1136 = vand.u32 %v33, 32
  %v1137 = vand.u32 %v34, 32
  %v1138 = vand.u32 %v35, 32
  %v1139 = vand.u32 %v36, 32
  %v1140 = vand.u32 %v37, 32
  %v1141 = vand.u32 %v38, 32
  %v1142 = vand.u32 %v39, 32
  %v1143 = vand.u32 %v40, 32
  %v1144 = vand.u32 %v41, 32
  %v1145 = vand.u32 %v42, 32
  %vm1146 = vcmp.ne.s32.totalorder %v1136, 0
  %vm1147 = vcmp.ne.s32.totalorder %v1137, 0
  %vm1148 = vcmp.ne.s32.totalorder %v1138, 0
  %vm1149 = vcmp.ne.s32.totalorder %v1139, 0
  %vm1150 = vcmp.ne.s32.totalorder %v1140, 0
  %vm1151 = vcmp.ne.s32.totalorder %v1141, 0
  %vm1152 = vcmp.ne.s32.totalorder %v1142, 0
  %vm1153 = vcmp.ne.s32.totalorder %v1143, 0
  %vm1154 = vcmp.ne.s32.totalorder %v1144, 0
  %vm1155 = vcmp.ne.s32.totalorder %v1145, 0
  %v1156 = vsel %vm1146, 1, 0
  %v1157 = vsel %vm1147, 1, 0
  %v1158 = vsel %vm1148, 1, 0
  %v1159 = vsel %vm1149, 1, 0
  %v1160 = vsel %vm1150, 1, 0
  %v1161 = vsel %vm1151, 1, 0
  %v1162 = vsel %vm1152, 1, 0
  %v1163 = vsel %vm1153, 1, 0
  %v1164 = vsel %vm1154, 1, 0
  %v1165 = vsel %vm1155, 1, 0
  %1166 = vset.pattern.permute.xlu0 0
  %1167 = vperm.xlu0 %1166, %v1156
  %v1168 = vpop.permute.xlu0 %1167
  %1169 = vset.pattern.permute.xlu0 0
  %1170 = vperm.xlu0 %1169, %v1157
  %v1171 = vpop.permute.xlu0 %1170
  %1172 = vset.pattern.permute.xlu0 0
  %1173 = vperm.xlu0 %1172, %v1158
  %v1174 = vpop.permute.xlu0 %1173
  %1175 = vset.pattern.permute.xlu0 0
  %1176 = vperm.xlu0 %1175, %v1159
  %v1177 = vpop.permute.xlu0 %1176
  %1178 = vset.pattern.permute.xlu0 0
  %1179 = vperm.xlu0 %1178, %v1160
  %v1180 = vpop.permute.xlu0 %1179
  %1181 = vset.pattern.permute.xlu0 0
  %1182 = vperm.xlu0 %1181, %v1161
  %v1183 = vpop.permute.xlu0 %1182
  %1184 = vset.pattern.permute.xlu0 0
  %1185 = vperm.xlu0 %1184, %v1162
  %v1186 = vpop.permute.xlu0 %1185
  %1187 = vset.pattern.permute.xlu0 0
  %1188 = vperm.xlu0 %1187, %v1163
  %v1189 = vpop.permute.xlu0 %1188
  %1190 = vset.pattern.permute.xlu0 0
  %1191 = vperm.xlu0 %1190, %v1164
  %v1192 = vpop.permute.xlu0 %1191
  %1193 = vset.pattern.permute.xlu0 0
  %1194 = vperm.xlu0 %1193, %v1165
  %v1195 = vpop.permute.xlu0 %1194
  %vm1196 = vcmp.eq.s32.totalorder %v1168, 1
  %vm1197 = vcmp.eq.s32.totalorder %v1171, 1
  %vm1198 = vcmp.eq.s32.totalorder %v1174, 1
  %vm1199 = vcmp.eq.s32.totalorder %v1177, 1
  %vm1200 = vcmp.eq.s32.totalorder %v1180, 1
  %vm1201 = vcmp.eq.s32.totalorder %v1183, 1
  %vm1202 = vcmp.eq.s32.totalorder %v1186, 1
  %vm1203 = vcmp.eq.s32.totalorder %v1189, 1
  %vm1204 = vcmp.eq.s32.totalorder %v1192, 1
  %vm1205 = vcmp.eq.s32.totalorder %v1195, 1
  %v1206 = vsel %vm1196, %v1126, %v1055
  %v1207 = vsel %vm1196, %v1116, %v1056
  %v1208 = vsel %vm1197, %v1127, %v1057
  %v1209 = vsel %vm1197, %v1117, %v1058
  %v1210 = vsel %vm1198, %v1128, %v1059
  %v1211 = vsel %vm1198, %v1118, %v1060
  %v1212 = vsel %vm1199, %v1129, %v1061
  %v1213 = vsel %vm1199, %v1119, %v1062
  %v1214 = vsel %vm1200, %v1130, %v1063
  %v1215 = vsel %vm1200, %v1120, %v1064
  %v1216 = vsel %vm1201, %v1131, %v1065
  %v1217 = vsel %vm1201, %v1121, %v1066
  %v1218 = vsel %vm1202, %v1132, %v1067
  %v1219 = vsel %vm1202, %v1122, %v1068
  %v1220 = vsel %vm1203, %v1133, %v1069
  %v1221 = vsel %vm1203, %v1123, %v1070
  %v1222 = vsel %vm1204, %v1134, %v1071
  %v1223 = vsel %vm1204, %v1124, %v1072
  %v1224 = vsel %vm1205, %v1135, %v1073
  %v1225 = vsel %vm1205, %v1125, %v1074
  %1226 = vrot.lane.b32.xlu0 %v1206, 64
  %v1227 = vpop.permute.xlu0 %1226
  %1228 = vrot.lane.b32.xlu0 %v1208, 64
  %v1229 = vpop.permute.xlu0 %1228
  %1230 = vrot.lane.b32.xlu0 %v1210, 64
  %v1231 = vpop.permute.xlu0 %1230
  %1232 = vrot.lane.b32.xlu0 %v1212, 64
  %v1233 = vpop.permute.xlu0 %1232
  %1234 = vrot.lane.b32.xlu0 %v1214, 64
  %v1235 = vpop.permute.xlu0 %1234
  %1236 = vrot.lane.b32.xlu0 %v1216, 64
  %v1237 = vpop.permute.xlu0 %1236
  %1238 = vrot.lane.b32.xlu0 %v1218, 64
  %v1239 = vpop.permute.xlu0 %1238
  %1240 = vrot.lane.b32.xlu0 %v1220, 64
  %v1241 = vpop.permute.xlu0 %1240
  %1242 = vrot.lane.b32.xlu0 %v1222, 64
  %v1243 = vpop.permute.xlu0 %1242
  %1244 = vrot.lane.b32.xlu0 %v1224, 64
  %v1245 = vpop.permute.xlu0 %1244
  %1246 = vrot.lane.b32.xlu0 %v1207, 64
  %v1247 = vpop.permute.xlu0 %1246
  %1248 = vrot.lane.b32.xlu0 %v1209, 64
  %v1249 = vpop.permute.xlu0 %1248
  %1250 = vrot.lane.b32.xlu0 %v1211, 64
  %v1251 = vpop.permute.xlu0 %1250
  %1252 = vrot.lane.b32.xlu0 %v1213, 64
  %v1253 = vpop.permute.xlu0 %1252
  %1254 = vrot.lane.b32.xlu0 %v1215, 64
  %v1255 = vpop.permute.xlu0 %1254
  %1256 = vrot.lane.b32.xlu0 %v1217, 64
  %v1257 = vpop.permute.xlu0 %1256
  %1258 = vrot.lane.b32.xlu0 %v1219, 64
  %v1259 = vpop.permute.xlu0 %1258
  %1260 = vrot.lane.b32.xlu0 %v1221, 64
  %v1261 = vpop.permute.xlu0 %1260
  %1262 = vrot.lane.b32.xlu0 %v1223, 64
  %v1263 = vpop.permute.xlu0 %1262
  %1264 = vrot.lane.b32.xlu0 %v1225, 64
  %v1265 = vpop.permute.xlu0 %1264
  %vm1266 = vcmp.lt.s32.totalorder %v44, 64
  %v1267 = vsel %vm1266, %v1227, %v1247
  %v1268 = vsel %vm1266, %v1229, %v1249
  %v1269 = vsel %vm1266, %v1231, %v1251
  %v1270 = vsel %vm1266, %v1233, %v1253
  %v1271 = vsel %vm1266, %v1235, %v1255
  %v1272 = vsel %vm1266, %v1237, %v1257
  %v1273 = vsel %vm1266, %v1239, %v1259
  %v1274 = vsel %vm1266, %v1241, %v1261
  %v1275 = vsel %vm1266, %v1243, %v1263
  %v1276 = vsel %vm1266, %v1245, %v1265
  %v1277 = vsel %vm1266, %v1247, %v1227
  %v1278 = vsel %vm1266, %v1249, %v1229
  %v1279 = vsel %vm1266, %v1251, %v1231
  %v1280 = vsel %vm1266, %v1253, %v1233
  %v1281 = vsel %vm1266, %v1255, %v1235
  %v1282 = vsel %vm1266, %v1257, %v1237
  %v1283 = vsel %vm1266, %v1259, %v1239
  %v1284 = vsel %vm1266, %v1261, %v1241
  %v1285 = vsel %vm1266, %v1263, %v1243
  %v1286 = vsel %vm1266, %v1265, %v1245
  %v1287 = vand.u32 %v33, 64
  %v1288 = vand.u32 %v34, 64
  %v1289 = vand.u32 %v35, 64
  %v1290 = vand.u32 %v36, 64
  %v1291 = vand.u32 %v37, 64
  %v1292 = vand.u32 %v38, 64
  %v1293 = vand.u32 %v39, 64
  %v1294 = vand.u32 %v40, 64
  %v1295 = vand.u32 %v41, 64
  %v1296 = vand.u32 %v42, 64
  %vm1297 = vcmp.ne.s32.totalorder %v1287, 0
  %vm1298 = vcmp.ne.s32.totalorder %v1288, 0
  %vm1299 = vcmp.ne.s32.totalorder %v1289, 0
  %vm1300 = vcmp.ne.s32.totalorder %v1290, 0
  %vm1301 = vcmp.ne.s32.totalorder %v1291, 0
  %vm1302 = vcmp.ne.s32.totalorder %v1292, 0
  %vm1303 = vcmp.ne.s32.totalorder %v1293, 0
  %vm1304 = vcmp.ne.s32.totalorder %v1294, 0
  %vm1305 = vcmp.ne.s32.totalorder %v1295, 0
  %vm1306 = vcmp.ne.s32.totalorder %v1296, 0
  %v1307 = vsel %vm1297, 1, 0
  %v1308 = vsel %vm1298, 1, 0
  %v1309 = vsel %vm1299, 1, 0
  %v1310 = vsel %vm1300, 1, 0
  %v1311 = vsel %vm1301, 1, 0
  %v1312 = vsel %vm1302, 1, 0
  %v1313 = vsel %vm1303, 1, 0
  %v1314 = vsel %vm1304, 1, 0
  %v1315 = vsel %vm1305, 1, 0
  %v1316 = vsel %vm1306, 1, 0
  %1317 = vset.pattern.permute.xlu0 0
  %1318 = vperm.xlu0 %1317, %v1307
  %v1319 = vpop.permute.xlu0 %1318
  %1320 = vset.pattern.permute.xlu0 0
  %1321 = vperm.xlu0 %1320, %v1308
  %v1322 = vpop.permute.xlu0 %1321
  %1323 = vset.pattern.permute.xlu0 0
  %1324 = vperm.xlu0 %1323, %v1309
  %v1325 = vpop.permute.xlu0 %1324
  %1326 = vset.pattern.permute.xlu0 0
  %1327 = vperm.xlu0 %1326, %v1310
  %v1328 = vpop.permute.xlu0 %1327
  %1329 = vset.pattern.permute.xlu0 0
  %1330 = vperm.xlu0 %1329, %v1311
  %v1331 = vpop.permute.xlu0 %1330
  %1332 = vset.pattern.permute.xlu0 0
  %1333 = vperm.xlu0 %1332, %v1312
  %v1334 = vpop.permute.xlu0 %1333
  %1335 = vset.pattern.permute.xlu0 0
  %1336 = vperm.xlu0 %1335, %v1313
  %v1337 = vpop.permute.xlu0 %1336
  %1338 = vset.pattern.permute.xlu0 0
  %1339 = vperm.xlu0 %1338, %v1314
  %v1340 = vpop.permute.xlu0 %1339
  %1341 = vset.pattern.permute.xlu0 0
  %1342 = vperm.xlu0 %1341, %v1315
  %v1343 = vpop.permute.xlu0 %1342
  %1344 = vset.pattern.permute.xlu0 0
  %1345 = vperm.xlu0 %1344, %v1316
  %v1346 = vpop.permute.xlu0 %1345
  %vm1347 = vcmp.eq.s32.totalorder %v1319, 1
  %vm1348 = vcmp.eq.s32.totalorder %v1322, 1
  %vm1349 = vcmp.eq.s32.totalorder %v1325, 1
  %vm1350 = vcmp.eq.s32.totalorder %v1328, 1
  %vm1351 = vcmp.eq.s32.totalorder %v1331, 1
  %vm1352 = vcmp.eq.s32.totalorder %v1334, 1
  %vm1353 = vcmp.eq.s32.totalorder %v1337, 1
  %vm1354 = vcmp.eq.s32.totalorder %v1340, 1
  %vm1355 = vcmp.eq.s32.totalorder %v1343, 1
  %vm1356 = vcmp.eq.s32.totalorder %v1346, 1
  %v1357 = vsel %vm1347, %v1277, %v1206
  %v1358 = vsel %vm1347, %v1267, %v1207
  %v1359 = vsel %vm1348, %v1278, %v1208
  %v1360 = vsel %vm1348, %v1268, %v1209
  %v1361 = vsel %vm1349, %v1279, %v1210
  %v1362 = vsel %vm1349, %v1269, %v1211
  %v1363 = vsel %vm1350, %v1280, %v1212
  %v1364 = vsel %vm1350, %v1270, %v1213
  %v1365 = vsel %vm1351, %v1281, %v1214
  %v1366 = vsel %vm1351, %v1271, %v1215
  %v1367 = vsel %vm1352, %v1282, %v1216
  %v1368 = vsel %vm1352, %v1272, %v1217
  %v1369 = vsel %vm1353, %v1283, %v1218
  %v1370 = vsel %vm1353, %v1273, %v1219
  %v1371 = vsel %vm1354, %v1284, %v1220
  %v1372 = vsel %vm1354, %v1274, %v1221
  %v1373 = vsel %vm1355, %v1285, %v1222
  %v1374 = vsel %vm1355, %v1275, %v1223
  %v1375 = vsel %vm1356, %v1286, %v1224
  %v1376 = vsel %vm1356, %v1276, %v1225
  %v1377 = vand.u32 %v33, 128
  %v1378 = vand.u32 %v34, 128
  %v1379 = vand.u32 %v35, 128
  %v1380 = vand.u32 %v36, 128
  %v1381 = vand.u32 %v37, 128
  %v1382 = vand.u32 %v38, 128
  %v1383 = vand.u32 %v39, 128
  %v1384 = vand.u32 %v40, 128
  %v1385 = vand.u32 %v41, 128
  %v1386 = vand.u32 %v42, 128
  %vm1387 = vcmp.ne.s32.totalorder %v1377, 0
  %vm1388 = vcmp.ne.s32.totalorder %v1378, 0
  %vm1389 = vcmp.ne.s32.totalorder %v1379, 0
  %vm1390 = vcmp.ne.s32.totalorder %v1380, 0
  %vm1391 = vcmp.ne.s32.totalorder %v1381, 0
  %vm1392 = vcmp.ne.s32.totalorder %v1382, 0
  %vm1393 = vcmp.ne.s32.totalorder %v1383, 0
  %vm1394 = vcmp.ne.s32.totalorder %v1384, 0
  %vm1395 = vcmp.ne.s32.totalorder %v1385, 0
  %vm1396 = vcmp.ne.s32.totalorder %v1386, 0
  %v1397 = vsel %vm1387, 1, 0
  %v1398 = vsel %vm1388, 1, 0
  %v1399 = vsel %vm1389, 1, 0
  %v1400 = vsel %vm1390, 1, 0
  %v1401 = vsel %vm1391, 1, 0
  %v1402 = vsel %vm1392, 1, 0
  %v1403 = vsel %vm1393, 1, 0
  %v1404 = vsel %vm1394, 1, 0
  %v1405 = vsel %vm1395, 1, 0
  %v1406 = vsel %vm1396, 1, 0
  %1407 = vset.pattern.permute.xlu0 0
  %1408 = vperm.xlu0 %1407, %v1397
  %v1409 = vpop.permute.xlu0 %1408
  %1410 = vset.pattern.permute.xlu0 0
  %1411 = vperm.xlu0 %1410, %v1398
  %v1412 = vpop.permute.xlu0 %1411
  %1413 = vset.pattern.permute.xlu0 0
  %1414 = vperm.xlu0 %1413, %v1399
  %v1415 = vpop.permute.xlu0 %1414
  %1416 = vset.pattern.permute.xlu0 0
  %1417 = vperm.xlu0 %1416, %v1400
  %v1418 = vpop.permute.xlu0 %1417
  %1419 = vset.pattern.permute.xlu0 0
  %1420 = vperm.xlu0 %1419, %v1401
  %v1421 = vpop.permute.xlu0 %1420
  %1422 = vset.pattern.permute.xlu0 0
  %1423 = vperm.xlu0 %1422, %v1402
  %v1424 = vpop.permute.xlu0 %1423
  %1425 = vset.pattern.permute.xlu0 0
  %1426 = vperm.xlu0 %1425, %v1403
  %v1427 = vpop.permute.xlu0 %1426
  %1428 = vset.pattern.permute.xlu0 0
  %1429 = vperm.xlu0 %1428, %v1404
  %v1430 = vpop.permute.xlu0 %1429
  %1431 = vset.pattern.permute.xlu0 0
  %1432 = vperm.xlu0 %1431, %v1405
  %v1433 = vpop.permute.xlu0 %1432
  %1434 = vset.pattern.permute.xlu0 0
  %1435 = vperm.xlu0 %1434, %v1406
  %v1436 = vpop.permute.xlu0 %1435
  %vm1437 = vcmp.eq.s32.totalorder %v1409, 1
  %vm1438 = vcmp.eq.s32.totalorder %v1412, 1
  %vm1439 = vcmp.eq.s32.totalorder %v1415, 1
  %vm1440 = vcmp.eq.s32.totalorder %v1418, 1
  %vm1441 = vcmp.eq.s32.totalorder %v1421, 1
  %vm1442 = vcmp.eq.s32.totalorder %v1424, 1
  %vm1443 = vcmp.eq.s32.totalorder %v1427, 1
  %vm1444 = vcmp.eq.s32.totalorder %v1430, 1
  %vm1445 = vcmp.eq.s32.totalorder %v1433, 1
  %vm1446 = vcmp.eq.s32.totalorder %v1436, 1
  %v1447 = vsel %vm1437, %v1358, %v1357
  %v1448 = vsel %vm1437, %v1357, %v1358
  %v1449 = vsel %vm1438, %v1360, %v1359
  %v1450 = vsel %vm1438, %v1359, %v1360
  %v1451 = vsel %vm1439, %v1362, %v1361
  %v1452 = vsel %vm1439, %v1361, %v1362
  %v1453 = vsel %vm1440, %v1364, %v1363
  %v1454 = vsel %vm1440, %v1363, %v1364
  %v1455 = vsel %vm1441, %v1366, %v1365
  %v1456 = vsel %vm1441, %v1365, %v1366
  %v1457 = vsel %vm1442, %v1368, %v1367
  %v1458 = vsel %vm1442, %v1367, %v1368
  %v1459 = vsel %vm1443, %v1370, %v1369
  %v1460 = vsel %vm1443, %v1369, %v1370
  %v1461 = vsel %vm1444, %v1372, %v1371
  %v1462 = vsel %vm1444, %v1371, %v1372
  %v1463 = vsel %vm1445, %v1374, %v1373
  %v1464 = vsel %vm1445, %v1373, %v1374
  %v1465 = vsel %vm1446, %v1376, %v1375
  %v1466 = vsel %vm1446, %v1375, %v1376
  %v1467 = vsub.s32 %v44, %v120
  %v1468 = vsub.s32 %v45, %v120
  %v1469 = vsub.s32 %v44, %v123
  %v1470 = vsub.s32 %v45, %v123
  %v1471 = vsub.s32 %v44, %v126
  %v1472 = vsub.s32 %v45, %v126
  %v1473 = vsub.s32 %v44, %v129
  %v1474 = vsub.s32 %v45, %v129
  %v1475 = vsub.s32 %v44, %v132
  %v1476 = vsub.s32 %v45, %v132
  %v1477 = vsub.s32 %v44, %v135
  %v1478 = vsub.s32 %v45, %v135
  %v1479 = vsub.s32 %v44, %v138
  %v1480 = vsub.s32 %v45, %v138
  %v1481 = vsub.s32 %v44, %v141
  %v1482 = vsub.s32 %v45, %v141
  %v1483 = vsub.s32 %v44, %v144
  %v1484 = vsub.s32 %v45, %v144
  %v1485 = vsub.s32 %v44, %v147
  %v1486 = vsub.s32 %v45, %v147
  %vm1487 = vcmp.ge.s32.totalorder %v1467, 0
  %vm1488 = vcmp.ge.s32.totalorder %v1468, 0
  %vm1489 = vcmp.ge.s32.totalorder %v1469, 0
  %vm1490 = vcmp.ge.s32.totalorder %v1470, 0
  %vm1491 = vcmp.ge.s32.totalorder %v1471, 0
  %vm1492 = vcmp.ge.s32.totalorder %v1472, 0
  %vm1493 = vcmp.ge.s32.totalorder %v1473, 0
  %vm1494 = vcmp.ge.s32.totalorder %v1474, 0
  %vm1495 = vcmp.ge.s32.totalorder %v1475, 0
  %vm1496 = vcmp.ge.s32.totalorder %v1476, 0
  %vm1497 = vcmp.ge.s32.totalorder %v1477, 0
  %vm1498 = vcmp.ge.s32.totalorder %v1478, 0
  %vm1499 = vcmp.ge.s32.totalorder %v1479, 0
  %vm1500 = vcmp.ge.s32.totalorder %v1480, 0
  %vm1501 = vcmp.ge.s32.totalorder %v1481, 0
  %vm1502 = vcmp.ge.s32.totalorder %v1482, 0
  %vm1503 = vcmp.ge.s32.totalorder %v1483, 0
  %vm1504 = vcmp.ge.s32.totalorder %v1484, 0
  %vm1505 = vcmp.ge.s32.totalorder %v1485, 0
  %vm1506 = vcmp.ge.s32.totalorder %v1486, 0
  %vm1507 = vcmp.lt.s32.totalorder %v1467, 25
  %vm1508 = vcmp.lt.s32.totalorder %v1468, 25
  %vm1509 = vcmp.lt.s32.totalorder %v1469, 25
  %vm1510 = vcmp.lt.s32.totalorder %v1470, 25
  %vm1511 = vcmp.lt.s32.totalorder %v1471, 25
  %vm1512 = vcmp.lt.s32.totalorder %v1472, 25
  %vm1513 = vcmp.lt.s32.totalorder %v1473, 25
  %vm1514 = vcmp.lt.s32.totalorder %v1474, 25
  %vm1515 = vcmp.lt.s32.totalorder %v1475, 25
  %vm1516 = vcmp.lt.s32.totalorder %v1476, 25
  %vm1517 = vcmp.lt.s32.totalorder %v1477, 25
  %vm1518 = vcmp.lt.s32.totalorder %v1478, 25
  %vm1519 = vcmp.lt.s32.totalorder %v1479, 25
  %vm1520 = vcmp.lt.s32.totalorder %v1480, 25
  %vm1521 = vcmp.lt.s32.totalorder %v1481, 25
  %vm1522 = vcmp.lt.s32.totalorder %v1482, 25
  %vm1523 = vcmp.lt.s32.totalorder %v1483, 25
  %vm1524 = vcmp.lt.s32.totalorder %v1484, 25
  %vm1525 = vcmp.lt.s32.totalorder %v1485, 25
  %vm1526 = vcmp.lt.s32.totalorder %v1486, 25
  %vm1527 = vmand %vm1487, %vm1507
  %vm1528 = vmand %vm1488, %vm1508
  %vm1529 = vmand %vm1489, %vm1509
  %vm1530 = vmand %vm1490, %vm1510
  %vm1531 = vmand %vm1491, %vm1511
  %vm1532 = vmand %vm1492, %vm1512
  %vm1533 = vmand %vm1493, %vm1513
  %vm1534 = vmand %vm1494, %vm1514
  %vm1535 = vmand %vm1495, %vm1515
  %vm1536 = vmand %vm1496, %vm1516
  %vm1537 = vmand %vm1497, %vm1517
  %vm1538 = vmand %vm1498, %vm1518
  %vm1539 = vmand %vm1499, %vm1519
  %vm1540 = vmand %vm1500, %vm1520
  %vm1541 = vmand %vm1501, %vm1521
  %vm1542 = vmand %vm1502, %vm1522
  %vm1543 = vmand %vm1503, %vm1523
  %vm1544 = vmand %vm1504, %vm1524
  %vm1545 = vmand %vm1505, %vm1525
  %vm1546 = vmand %vm1506, %vm1526
  %v1547 = vsel %vm1527, %v1447, %v13
  %v1548 = vsel %vm1528, %v1448, %v14
  %v1549 = vsel %vm1529, %v1449, %v15
  %v1550 = vsel %vm1530, %v1450, %v16
  %v1551 = vsel %vm1531, %v1451, %v17
  %v1552 = vsel %vm1532, %v1452, %v18
  %v1553 = vsel %vm1533, %v1453, %v19
  %v1554 = vsel %vm1534, %v1454, %v20
  %v1555 = vsel %vm1535, %v1455, %v21
  %v1556 = vsel %vm1536, %v1456, %v22
  %v1557 = vsel %vm1537, %v1457, %v23
  %v1558 = vsel %vm1538, %v1458, %v24
  %v1559 = vsel %vm1539, %v1459, %v25
  %v1560 = vsel %vm1540, %v1460, %v26
  %v1561 = vsel %vm1541, %v1461, %v27
  %v1562 = vsel %vm1542, %v1462, %v28
  %v1563 = vsel %vm1543, %v1463, %v29
  %v1564 = vsel %vm1544, %v1464, %v30
  %v1565 = vsel %vm1545, %v1465, %v31
  %v1566 = vsel %vm1546, %v1466, %v32
  %1567 = vst [vmem:[%s3] sm:$0xff] %v1547
  %1568 = vst [vmem:[%s3 + $0x8] sm:$0xff] %v1548
  %1569 = vst [vmem:[%s3 + $0x10] sm:$0xff] %v1549
  %1570 = vst [vmem:[%s3 + $0x18] sm:$0xff] %v1550
  %1571 = vst [vmem:[%s3 + $0x20] sm:$0xff] %v1551
  %1572 = vst [vmem:[%s3 + $0x28] sm:$0xff] %v1552
  %1573 = vst [vmem:[%s3 + $0x30] sm:$0xff] %v1553
  %1574 = vst [vmem:[%s3 + $0x38] sm:$0xff] %v1554
  %1575 = vst [vmem:[%s3 + $0x40] sm:$0xff] %v1555
  %1576 = vst [vmem:[%s3 + $0x48] sm:$0xff] %v1556
  %1577 = vst [vmem:[%s3 + $0x50] sm:$0xff] %v1557
  %1578 = vst [vmem:[%s3 + $0x58] sm:$0xff] %v1558
  %1579 = vst [vmem:[%s3 + $0x60] sm:$0xff] %v1559
  %1580 = vst [vmem:[%s3 + $0x68] sm:$0xff] %v1560
  %1581 = vst [vmem:[%s3 + $0x70] sm:$0xff] %v1561
  %1582 = vst [vmem:[%s3 + $0x78] sm:$0xff] %v1562
  %1583 = vst [vmem:[%s3 + $0x80] sm:$0xff] %v1563
  %1584 = vst [vmem:[%s3 + $0x88] sm:$0xff] %v1564
  %1585 = vst [vmem:[%s3 + $0x90] sm:$0xff] %v1565
  %1586 = vst [vmem:[%s3 + $0x98] sm:$0xff] %v1566
  // Predicated region
  $region10: #{crop_new.1} parent=0 // pred_check
    _
  $region11: #{crop_new.1} parent=0 // pred_check_branch
    %1588 = sbr.rel (0) target = $region13
  $region12: #{crop_new.1} parent=0 // pred_region
    _
  $region13: #{crop_new.1} parent=0 // pred_fallthru
    _
  // Predicated region
  $region14: #{crop_new.1} parent=0 // pred_check
    _
  $region15: #{crop_new.1} parent=0 // pred_check_branch
    %1590 = sbr.rel (0) target = $region17
  $region16: #{crop_new.1} parent=0 // pred_region
    _
  $region17: #{crop_new.1} parent=0 // pred_fallthru
    _
  // Predicated region
  $region18: #{crop_new.1} parent=0 // pred_check
    _
  $region19: #{crop_new.1} parent=0 // pred_check_branch
    %1592 = sbr.rel (0) target = $region21
  $region20: #{crop_new.1} parent=0 // pred_region
    _
  $region21: #{crop_new.1} parent=0 // pred_fallthru
    _
  // Predicated region
  $region22: #{crop_new.1} parent=0 // pred_check
    _
  $region23: #{crop_new.1} parent=0 // pred_check_branch
    %1594 = sbr.rel (0) target = $region25
  $region24: #{crop_new.1} parent=0 // pred_region
    _
  $region25: #{crop_new.1} parent=0 // pred_fallthru
    _

</llo_original>
